<compile_context>
chip_gen: v5e
topology: v5e:2x2
jax: 0.10.0
libtpu: 0.0.40
codegen_flags: <defaults>
</compile_context>

<pallas_src>
import functools

import jax
import jax.numpy as jnp
from jax.experimental import pallas as pl
from jax.experimental.pallas import tpu as pltpu


def _teprnn_kernel(x_ref, h0_ref, c0_ref, wih_ref, whh_ref, b_ref,
                   wd_ref, bd_ref,
                   logits_ref, hn_ref, cn_ref,
                   h_all_ref, *, seq, batch):
    """Fused LSTM (all timesteps) + dense head, single invocation.

    x_ref:      (S*Bp, F)   time-major flattened (batch padded to Bp=8k) input
    h0/c0_ref:  (Bp, H)
    wih_ref:    (4, F, H)   per-gate W_ih^T, gate order [i, f, g, o]
    whh_ref:    (4, H, H)   per-gate W_hh^T
    b_ref:      (4, 1, H)   per-gate (b_ih + b_hh)
    wd_ref:     (H, C)      dense.weight^T
    bd_ref:     (1, C)      dense.bias
    logits_ref: (S*Bp, C)
    hn/cn_ref:  (Bp, H)
    h_all_ref:  (S*Bp, H)   VMEM scratch holding every timestep's hidden state
    """
    x = x_ref[...]                                             # (S*Bp, F)

    # --- batched, non-recurrent input projection (bias folded in, once) ---
    ig_i = jnp.dot(x, wih_ref[0], preferred_element_type=jnp.float32) + b_ref[0]
    ig_f = jnp.dot(x, wih_ref[1], preferred_element_type=jnp.float32) + b_ref[1]
    ig_g = jnp.dot(x, wih_ref[2], preferred_element_type=jnp.float32) + b_ref[2]
    ig_o = jnp.dot(x, wih_ref[3], preferred_element_type=jnp.float32) + b_ref[3]

    w_i = whh_ref[0]
    w_f = whh_ref[1]
    w_g = whh_ref[2]
    w_o = whh_ref[3]

    h = h0_ref[...]                                            # (Bp, H)
    c = c0_ref[...]                                            # (Bp, H)

    # --- serial recurrence (statically unrolled; seq is small) ---
    # batch is a multiple of 8, so lo/hi are sublane-tile aligned: every
    # slice below is a clean vreg view and every store is unmasked.
    for t in range(seq):
        lo = t * batch
        hi = lo + batch
        i_t = jax.nn.sigmoid(
            ig_i[lo:hi] + jnp.dot(h, w_i, preferred_element_type=jnp.float32))
        f_t = jax.nn.sigmoid(
            ig_f[lo:hi] + jnp.dot(h, w_f, preferred_element_type=jnp.float32))
        g_t = jnp.tanh(
            ig_g[lo:hi] + jnp.dot(h, w_g, preferred_element_type=jnp.float32))
        o_t = jax.nn.sigmoid(
            ig_o[lo:hi] + jnp.dot(h, w_o, preferred_element_type=jnp.float32))
        c = f_t * c + i_t * g_t
        h = o_t * jnp.tanh(c)
        h_all_ref[lo:hi, :] = h

    hn_ref[...] = h
    cn_ref[...] = c

    # --- dense head over ALL timesteps at once (single matmul + store) ---
    logits_ref[...] = (jnp.dot(h_all_ref[...], wd_ref[...],
                               preferred_element_type=jnp.float32)
                       + bd_ref[...])


def teprnn_forward(x, prev_state, params):
    """Pallas implementation of TEPRNN.forward(x, prev_state).

    x:          (batch, seq, features)  float32  (batch_first=True)
    prev_state: (h0, c0) each (1, batch, lstm_size)
    params:     packed kernel params (see _pack_params)
    returns:    logits (batch, seq, class_count), (h_n, c_n) each (1, B, H)
    """
    wih_g, whh_g, b_g, wd_t, bd_2d = params
    h0, c0 = prev_state

    B, S, F = x.shape
    H = whh_g.shape[-1]
    C = wd_t.shape[1]

    # Pad batch up to a sublane multiple so every per-step slice / store in
    # the kernel is (8,128)-tile aligned.  Padded rows occupy vreg sublanes
    # that would be wasted anyway; they are dropped below.
    Bp = max(8, ((B + 7) // 8) * 8)
    pad = Bp - B

    # time-major, batch-padded, flattened to (S*Bp, F) so the input
    # projection runs with M = S*Bp rows on the MXU.
    x_tm = jnp.transpose(x, (1, 0, 2)).astype(jnp.float32)        # (S, B, F)
    if pad:
        x_tm = jnp.pad(x_tm, ((0, 0), (0, pad), (0, 0)))
    x_flat = x_tm.reshape(S * Bp, F)

    h0_2d = h0.reshape(B, H).astype(jnp.float32)
    c0_2d = c0.reshape(B, H).astype(jnp.float32)
    if pad:
        h0_2d = jnp.pad(h0_2d, ((0, pad), (0, 0)))
        c0_2d = jnp.pad(c0_2d, ((0, pad), (0, 0)))

    kernel = functools.partial(_teprnn_kernel, seq=S, batch=Bp)
    vmem = pl.BlockSpec(memory_space=pltpu.MemorySpace.VMEM)

    logits_flat, h_n, c_n = pl.pallas_call(
        kernel,
        out_shape=(
            jax.ShapeDtypeStruct((S * Bp, C), jnp.float32),
            jax.ShapeDtypeStruct((Bp, H), jnp.float32),
            jax.ShapeDtypeStruct((Bp, H), jnp.float32),
        ),
        in_specs=[vmem] * 8,
        out_specs=(vmem, vmem, vmem),
        scratch_shapes=[pltpu.VMEM((S * Bp, H), jnp.float32)],
    )(x_flat, h0_2d, c0_2d, wih_g, whh_g, b_g, wd_t, bd_2d)

    logits = jnp.transpose(logits_flat.reshape(S, Bp, C), (1, 0, 2))[:B]  # (B,S,C)
    h_n = h_n[:B]
    c_n = c_n[:B]
    return logits, (h_n[None, ...], c_n[None, ...])


def _pack_params(w_ih, w_hh, b_ih, b_hh, w_d, b_d):
    """Pre-split per gate + pre-transpose for the kernel (done once, outside)."""
    H = w_hh.shape[1]
    F = w_ih.shape[1]
    C = w_d.shape[0]
    wih_g = jnp.transpose(w_ih.reshape(4, H, F), (0, 2, 1))    # (4, F, H)
    whh_g = jnp.transpose(w_hh.reshape(4, H, H), (0, 2, 1))    # (4, H, H)
    b_g = (b_ih + b_hh).reshape(4, 1, H)                       # (4, 1, H)
    wd_t = w_d.T                                               # (H, C)
    bd_2d = b_d.reshape(1, C)                                  # (1, C)
    return (wih_g.astype(jnp.float32), whh_g.astype(jnp.float32),
            b_g.astype(jnp.float32), wd_t.astype(jnp.float32),
            bd_2d.astype(jnp.float32))


def _make_params(key, features_count, lstm_size, class_count):
    """Deterministic synthetic parameters (PyTorch-style uniform init)."""
    H, F, C = lstm_size, features_count, class_count
    k = 1.0 / jnp.sqrt(jnp.float32(H))
    ks = jax.random.split(key, 6)
    u = lambda kk, shape: jax.random.uniform(kk, shape, jnp.float32, -k, k)
    w_ih = u(ks[0], (4 * H, F))       # torch lstm.weight_ih_l0
    w_hh = u(ks[1], (4 * H, H))       # torch lstm.weight_hh_l0
    b_ih = u(ks[2], (4 * H,))
    b_hh = u(ks[3], (4 * H,))
    w_d = u(ks[4], (C, H))            # torch dense.weight
    b_d = u(ks[5], (C,))
    raw = (w_ih, w_hh, b_ih, b_hh, w_d, b_d)
    return _pack_params(*raw), raw


def _reference_forward(x, prev_state, raw_params):
    """Pure-JAX reference matching PyTorch LSTM(batch_first) + Linear."""
    w_ih, w_hh, b_ih, b_hh, w_d, b_d = raw_params
    h0, c0 = prev_state
    H = w_hh.shape[1]
    h = h0[0]
    c = c0[0]

    def step(carry, x_t):
        h, c = carry
        gates = x_t @ w_ih.T + b_ih + h @ w_hh.T + b_hh
        i = jax.nn.sigmoid(gates[:, 0 * H:1 * H])
        f = jax.nn.sigmoid(gates[:, 1 * H:2 * H])
        g = jnp.tanh(gates[:, 2 * H:3 * H])
        o = jax.nn.sigmoid(gates[:, 3 * H:4 * H])
        c = f * c + i * g
        h = o * jnp.tanh(c)
        return (h, c), h

    (h, c), hs = jax.lax.scan(step, (h, c), jnp.transpose(x, (1, 0, 2)))
    out = jnp.transpose(hs, (1, 0, 2))                      # (B, S, H)
    logits = out @ w_d.T + b_d
    return logits, (h[None], c[None])


if __name__ == "__main__":
    # Shapes consistent with TEPRNN(seq_size=8, features_count=4,
    # class_count=4, lstm_size=32).
    batch, seq, features, hidden, classes = 2, 8, 4, 32, 4

    key = jax.random.PRNGKey(0)
    k_x, k_p = jax.random.split(key)

    x = jax.random.normal(k_x, (batch, seq, features), jnp.float32)
    prev_state = (jnp.zeros((1, batch, hidden), jnp.float32),
                  jnp.zeros((1, batch, hidden), jnp.float32))

    params, raw_params = _make_params(k_p, features, hidden, classes)

    logits, (h_n, c_n) = jax.jit(teprnn_forward)(x, prev_state, params)
    jax.block_until_ready((logits, h_n, c_n))

    # Sanity check against a pure-JAX reference of the PyTorch semantics.
    ref_logits, (ref_h, ref_c) = _reference_forward(x, prev_state, raw_params)
    assert logits.shape == (batch, seq, classes)
    assert h_n.shape == (1, batch, hidden) and c_n.shape == (1, batch, hidden)
    assert jnp.allclose(logits, ref_logits, atol=1e-5, rtol=1e-5)
    assert jnp.allclose(h_n, ref_h, atol=1e-5, rtol=1e-5)
    assert jnp.allclose(c_n, ref_c, atol=1e-5, rtol=1e-5)

    print("KERNEL_OK")
</pallas_src>

<mosaic_0001>
module attributes {stable_mosaic.version = 11 : i64} {
  func.func @_teprnn_kernel(%arg0: memref<64x4xf32, #tpu.memory_space<vmem>>, %arg1: memref<8x32xf32, #tpu.memory_space<vmem>>, %arg2: memref<8x32xf32, #tpu.memory_space<vmem>>, %arg3: memref<4x4x32xf32, #tpu.memory_space<vmem>>, %arg4: memref<4x32x32xf32, #tpu.memory_space<vmem>>, %arg5: memref<4x1x32xf32, #tpu.memory_space<vmem>>, %arg6: memref<32x4xf32, #tpu.memory_space<vmem>>, %arg7: memref<1x4xf32, #tpu.memory_space<vmem>>, %arg8: memref<64x4xf32, #tpu.memory_space<vmem>>, %arg9: memref<8x32xf32, #tpu.memory_space<vmem>>, %arg10: memref<8x32xf32, #tpu.memory_space<vmem>>, %arg11: memref<64x32xf32, #tpu.memory_space<vmem>>) attributes {dimension_semantics = [], scalar_prefetch = 0 : i64, scratch_operands = 1 : i64, tpu.core_type = #tpu.core_type<tc>} {
    %c0 = arith.constant 0 : index
    %c0_0 = arith.constant 0 : index
    %0 = vector.load %arg0[%c0, %c0_0] : memref<64x4xf32, #tpu.memory_space<vmem>>, vector<64x4xf32>
    %c0_1 = arith.constant 0 : index
    %c0_2 = arith.constant 0 : index
    %c0_3 = arith.constant 0 : index
    %1 = vector.load %arg3[%c0_1, %c0_2, %c0_3] : memref<4x4x32xf32, #tpu.memory_space<vmem>>, vector<1x4x32xf32>
    %2 = vector.shape_cast %1 : vector<1x4x32xf32> to vector<4x32xf32>
    %cst = arith.constant dense<0.000000e+00> : vector<64x32xf32>
    %3 = tpu.matmul %0, %2, %cst {dimension_numbers = #tpu.dot_dimension_numbers<[1], [0], [0], [1], [0, 0, 1, 1], [], []>} : vector<64x4xf32>, vector<4x32xf32>, vector<64x32xf32> -> vector<64x32xf32>
    %c0_4 = arith.constant 0 : index
    %c0_5 = arith.constant 0 : index
    %c0_6 = arith.constant 0 : index
    %4 = vector.load %arg5[%c0_4, %c0_5, %c0_6] : memref<4x1x32xf32, #tpu.memory_space<vmem>>, vector<1x1x32xf32>
    %5 = vector.shape_cast %4 : vector<1x1x32xf32> to vector<1x32xf32>
    %6 = vector.broadcast %5 : vector<1x32xf32> to vector<64x32xf32>
    %7 = arith.addf %3, %6 : vector<64x32xf32>
    %c1 = arith.constant 1 : index
    %c0_7 = arith.constant 0 : index
    %c0_8 = arith.constant 0 : index
    %8 = vector.load %arg3[%c1, %c0_7, %c0_8] : memref<4x4x32xf32, #tpu.memory_space<vmem>>, vector<1x4x32xf32>
    %9 = vector.shape_cast %8 : vector<1x4x32xf32> to vector<4x32xf32>
    %cst_9 = arith.constant dense<0.000000e+00> : vector<64x32xf32>
    %10 = tpu.matmul %0, %9, %cst_9 {dimension_numbers = #tpu.dot_dimension_numbers<[1], [0], [0], [1], [0, 0, 1, 1], [], []>} : vector<64x4xf32>, vector<4x32xf32>, vector<64x32xf32> -> vector<64x32xf32>
    %c1_10 = arith.constant 1 : index
    %c0_11 = arith.constant 0 : index
    %c0_12 = arith.constant 0 : index
    %11 = vector.load %arg5[%c1_10, %c0_11, %c0_12] : memref<4x1x32xf32, #tpu.memory_space<vmem>>, vector<1x1x32xf32>
    %12 = vector.shape_cast %11 : vector<1x1x32xf32> to vector<1x32xf32>
    %13 = vector.broadcast %12 : vector<1x32xf32> to vector<64x32xf32>
    %14 = arith.addf %10, %13 : vector<64x32xf32>
    %c2 = arith.constant 2 : index
    %c0_13 = arith.constant 0 : index
    %c0_14 = arith.constant 0 : index
    %15 = vector.load %arg3[%c2, %c0_13, %c0_14] : memref<4x4x32xf32, #tpu.memory_space<vmem>>, vector<1x4x32xf32>
    %16 = vector.shape_cast %15 : vector<1x4x32xf32> to vector<4x32xf32>
    %cst_15 = arith.constant dense<0.000000e+00> : vector<64x32xf32>
    %17 = tpu.matmul %0, %16, %cst_15 {dimension_numbers = #tpu.dot_dimension_numbers<[1], [0], [0], [1], [0, 0, 1, 1], [], []>} : vector<64x4xf32>, vector<4x32xf32>, vector<64x32xf32> -> vector<64x32xf32>
    %c2_16 = arith.constant 2 : index
    %c0_17 = arith.constant 0 : index
    %c0_18 = arith.constant 0 : index
    %18 = vector.load %arg5[%c2_16, %c0_17, %c0_18] : memref<4x1x32xf32, #tpu.memory_space<vmem>>, vector<1x1x32xf32>
    %19 = vector.shape_cast %18 : vector<1x1x32xf32> to vector<1x32xf32>
    %20 = vector.broadcast %19 : vector<1x32xf32> to vector<64x32xf32>
    %21 = arith.addf %17, %20 : vector<64x32xf32>
    %c3 = arith.constant 3 : index
    %c0_19 = arith.constant 0 : index
    %c0_20 = arith.constant 0 : index
    %22 = vector.load %arg3[%c3, %c0_19, %c0_20] : memref<4x4x32xf32, #tpu.memory_space<vmem>>, vector<1x4x32xf32>
    %23 = vector.shape_cast %22 : vector<1x4x32xf32> to vector<4x32xf32>
    %cst_21 = arith.constant dense<0.000000e+00> : vector<64x32xf32>
    %24 = tpu.matmul %0, %23, %cst_21 {dimension_numbers = #tpu.dot_dimension_numbers<[1], [0], [0], [1], [0, 0, 1, 1], [], []>} : vector<64x4xf32>, vector<4x32xf32>, vector<64x32xf32> -> vector<64x32xf32>
    %c3_22 = arith.constant 3 : index
    %c0_23 = arith.constant 0 : index
    %c0_24 = arith.constant 0 : index
    %25 = vector.load %arg5[%c3_22, %c0_23, %c0_24] : memref<4x1x32xf32, #tpu.memory_space<vmem>>, vector<1x1x32xf32>
    %26 = vector.shape_cast %25 : vector<1x1x32xf32> to vector<1x32xf32>
    %27 = vector.broadcast %26 : vector<1x32xf32> to vector<64x32xf32>
    %28 = arith.addf %24, %27 : vector<64x32xf32>
    %c0_25 = arith.constant 0 : index
    %c0_26 = arith.constant 0 : index
    %c0_27 = arith.constant 0 : index
    %29 = vector.load %arg4[%c0_25, %c0_26, %c0_27] : memref<4x32x32xf32, #tpu.memory_space<vmem>>, vector<1x32x32xf32>
    %30 = vector.shape_cast %29 : vector<1x32x32xf32> to vector<32x32xf32>
    %c1_28 = arith.constant 1 : index
    %c0_29 = arith.constant 0 : index
    %c0_30 = arith.constant 0 : index
    %31 = vector.load %arg4[%c1_28, %c0_29, %c0_30] : memref<4x32x32xf32, #tpu.memory_space<vmem>>, vector<1x32x32xf32>
    %32 = vector.shape_cast %31 : vector<1x32x32xf32> to vector<32x32xf32>
    %c2_31 = arith.constant 2 : index
    %c0_32 = arith.constant 0 : index
    %c0_33 = arith.constant 0 : index
    %33 = vector.load %arg4[%c2_31, %c0_32, %c0_33] : memref<4x32x32xf32, #tpu.memory_space<vmem>>, vector<1x32x32xf32>
    %34 = vector.shape_cast %33 : vector<1x32x32xf32> to vector<32x32xf32>
    %c3_34 = arith.constant 3 : index
    %c0_35 = arith.constant 0 : index
    %c0_36 = arith.constant 0 : index
    %35 = vector.load %arg4[%c3_34, %c0_35, %c0_36] : memref<4x32x32xf32, #tpu.memory_space<vmem>>, vector<1x32x32xf32>
    %36 = vector.shape_cast %35 : vector<1x32x32xf32> to vector<32x32xf32>
    %c0_37 = arith.constant 0 : index
    %c0_38 = arith.constant 0 : index
    %37 = vector.load %arg1[%c0_37, %c0_38] : memref<8x32xf32, #tpu.memory_space<vmem>>, vector<8x32xf32>
    %c0_39 = arith.constant 0 : index
    %c0_40 = arith.constant 0 : index
    %38 = vector.load %arg2[%c0_39, %c0_40] : memref<8x32xf32, #tpu.memory_space<vmem>>, vector<8x32xf32>
    %39 = vector.extract_strided_slice %7 {offsets = [0, 0], sizes = [8, 32], strides = [1, 1]} : vector<64x32xf32> to vector<8x32xf32>
    %cst_41 = arith.constant dense<0.000000e+00> : vector<8x32xf32>
    %40 = tpu.matmul %37, %30, %cst_41 {dimension_numbers = #tpu.dot_dimension_numbers<[1], [0], [0], [1], [0, 0, 1, 1], [], []>} : vector<8x32xf32>, vector<32x32xf32>, vector<8x32xf32> -> vector<8x32xf32>
    %41 = arith.addf %39, %40 : vector<8x32xf32>
    %42 = arith.negf %41 : vector<8x32xf32>
    %43 = math.exp %42 : vector<8x32xf32>
    %cst_42 = arith.constant 1.000000e+00 : f32
    %44 = vector.broadcast %cst_42 : f32 to vector<8x32xf32>
    %45 = arith.addf %44, %43 : vector<8x32xf32>
    %46 = arith.divf %44, %45 : vector<8x32xf32>
    %47 = vector.extract_strided_slice %14 {offsets = [0, 0], sizes = [8, 32], strides = [1, 1]} : vector<64x32xf32> to vector<8x32xf32>
    %cst_43 = arith.constant dense<0.000000e+00> : vector<8x32xf32>
    %48 = tpu.matmul %37, %32, %cst_43 {dimension_numbers = #tpu.dot_dimension_numbers<[1], [0], [0], [1], [0, 0, 1, 1], [], []>} : vector<8x32xf32>, vector<32x32xf32>, vector<8x32xf32> -> vector<8x32xf32>
    %49 = arith.addf %47, %48 : vector<8x32xf32>
    %50 = arith.negf %49 : vector<8x32xf32>
    %51 = math.exp %50 : vector<8x32xf32>
    %cst_44 = arith.constant 1.000000e+00 : f32
    %52 = vector.broadcast %cst_44 : f32 to vector<8x32xf32>
    %53 = arith.addf %52, %51 : vector<8x32xf32>
    %54 = arith.divf %52, %53 : vector<8x32xf32>
    %55 = vector.extract_strided_slice %21 {offsets = [0, 0], sizes = [8, 32], strides = [1, 1]} : vector<64x32xf32> to vector<8x32xf32>
    %cst_45 = arith.constant dense<0.000000e+00> : vector<8x32xf32>
    %56 = tpu.matmul %37, %34, %cst_45 {dimension_numbers = #tpu.dot_dimension_numbers<[1], [0], [0], [1], [0, 0, 1, 1], [], []>} : vector<8x32xf32>, vector<32x32xf32>, vector<8x32xf32> -> vector<8x32xf32>
    %57 = arith.addf %55, %56 : vector<8x32xf32>
    %58 = math.tanh %57 : vector<8x32xf32>
    %59 = vector.extract_strided_slice %28 {offsets = [0, 0], sizes = [8, 32], strides = [1, 1]} : vector<64x32xf32> to vector<8x32xf32>
    %cst_46 = arith.constant dense<0.000000e+00> : vector<8x32xf32>
    %60 = tpu.matmul %37, %36, %cst_46 {dimension_numbers = #tpu.dot_dimension_numbers<[1], [0], [0], [1], [0, 0, 1, 1], [], []>} : vector<8x32xf32>, vector<32x32xf32>, vector<8x32xf32> -> vector<8x32xf32>
    %61 = arith.addf %59, %60 : vector<8x32xf32>
    %62 = arith.negf %61 : vector<8x32xf32>
    %63 = math.exp %62 : vector<8x32xf32>
    %cst_47 = arith.constant 1.000000e+00 : f32
    %64 = vector.broadcast %cst_47 : f32 to vector<8x32xf32>
    %65 = arith.addf %64, %63 : vector<8x32xf32>
    %66 = arith.divf %64, %65 : vector<8x32xf32>
    %67 = arith.mulf %54, %38 : vector<8x32xf32>
    %68 = arith.mulf %46, %58 : vector<8x32xf32>
    %69 = arith.addf %67, %68 : vector<8x32xf32>
    %70 = math.tanh %69 : vector<8x32xf32>
    %71 = arith.mulf %66, %70 : vector<8x32xf32>
    %c0_48 = arith.constant 0 : index
    %c0_49 = arith.constant 0 : index
    %72 = vector.load %arg11[%c0_48, %c0_49] : memref<64x32xf32, #tpu.memory_space<vmem>>, vector<8x32xf32>
    tpu.vector_store %arg11[%c0_48, %c0_49], %71 {strides = array<i32>} : memref<64x32xf32, #tpu.memory_space<vmem>>, vector<8x32xf32>,
    %73 = vector.extract_strided_slice %7 {offsets = [8, 0], sizes = [8, 32], strides = [1, 1]} : vector<64x32xf32> to vector<8x32xf32>
    %cst_50 = arith.constant dense<0.000000e+00> : vector<8x32xf32>
    %74 = tpu.matmul %71, %30, %cst_50 {dimension_numbers = #tpu.dot_dimension_numbers<[1], [0], [0], [1], [0, 0, 1, 1], [], []>} : vector<8x32xf32>, vector<32x32xf32>, vector<8x32xf32> -> vector<8x32xf32>
    %75 = arith.addf %73, %74 : vector<8x32xf32>
    %76 = arith.negf %75 : vector<8x32xf32>
    %77 = math.exp %76 : vector<8x32xf32>
    %cst_51 = arith.constant 1.000000e+00 : f32
    %78 = vector.broadcast %cst_51 : f32 to vector<8x32xf32>
    %79 = arith.addf %78, %77 : vector<8x32xf32>
    %80 = arith.divf %78, %79 : vector<8x32xf32>
    %81 = vector.extract_strided_slice %14 {offsets = [8, 0], sizes = [8, 32], strides = [1, 1]} : vector<64x32xf32> to vector<8x32xf32>
    %cst_52 = arith.constant dense<0.000000e+00> : vector<8x32xf32>
    %82 = tpu.matmul %71, %32, %cst_52 {dimension_numbers = #tpu.dot_dimension_numbers<[1], [0], [0], [1], [0, 0, 1, 1], [], []>} : vector<8x32xf32>, vector<32x32xf32>, vector<8x32xf32> -> vector<8x32xf32>
    %83 = arith.addf %81, %82 : vector<8x32xf32>
    %84 = arith.negf %83 : vector<8x32xf32>
    %85 = math.exp %84 : vector<8x32xf32>
    %cst_53 = arith.constant 1.000000e+00 : f32
    %86 = vector.broadcast %cst_53 : f32 to vector<8x32xf32>
    %87 = arith.addf %86, %85 : vector<8x32xf32>
    %88 = arith.divf %86, %87 : vector<8x32xf32>
    %89 = vector.extract_strided_slice %21 {offsets = [8, 0], sizes = [8, 32], strides = [1, 1]} : vector<64x32xf32> to vector<8x32xf32>
    %cst_54 = arith.constant dense<0.000000e+00> : vector<8x32xf32>
    %90 = tpu.matmul %71, %34, %cst_54 {dimension_numbers = #tpu.dot_dimension_numbers<[1], [0], [0], [1], [0, 0, 1, 1], [], []>} : vector<8x32xf32>, vector<32x32xf32>, vector<8x32xf32> -> vector<8x32xf32>
    %91 = arith.addf %89, %90 : vector<8x32xf32>
    %92 = math.tanh %91 : vector<8x32xf32>
    %93 = vector.extract_strided_slice %28 {offsets = [8, 0], sizes = [8, 32], strides = [1, 1]} : vector<64x32xf32> to vector<8x32xf32>
    %cst_55 = arith.constant dense<0.000000e+00> : vector<8x32xf32>
    %94 = tpu.matmul %71, %36, %cst_55 {dimension_numbers = #tpu.dot_dimension_numbers<[1], [0], [0], [1], [0, 0, 1, 1], [], []>} : vector<8x32xf32>, vector<32x32xf32>, vector<8x32xf32> -> vector<8x32xf32>
    %95 = arith.addf %93, %94 : vector<8x32xf32>
    %96 = arith.negf %95 : vector<8x32xf32>
    %97 = math.exp %96 : vector<8x32xf32>
    %cst_56 = arith.constant 1.000000e+00 : f32
    %98 = vector.broadcast %cst_56 : f32 to vector<8x32xf32>
    %99 = arith.addf %98, %97 : vector<8x32xf32>
    %100 = arith.divf %98, %99 : vector<8x32xf32>
    %101 = arith.mulf %88, %69 : vector<8x32xf32>
    %102 = arith.mulf %80, %92 : vector<8x32xf32>
    %103 = arith.addf %101, %102 : vector<8x32xf32>
    %104 = math.tanh %103 : vector<8x32xf32>
    %105 = arith.mulf %100, %104 : vector<8x32xf32>
    %c8 = arith.constant 8 : index
    %c0_57 = arith.constant 0 : index
    %106 = vector.load %arg11[%c8, %c0_57] : memref<64x32xf32, #tpu.memory_space<vmem>>, vector<8x32xf32>
    tpu.vector_store %arg11[%c8, %c0_57], %105 {strides = array<i32>} : memref<64x32xf32, #tpu.memory_space<vmem>>, vector<8x32xf32>,
    %107 = vector.extract_strided_slice %7 {offsets = [16, 0], sizes = [8, 32], strides = [1, 1]} : vector<64x32xf32> to vector<8x32xf32>
    %cst_58 = arith.constant dense<0.000000e+00> : vector<8x32xf32>
    %108 = tpu.matmul %105, %30, %cst_58 {dimension_numbers = #tpu.dot_dimension_numbers<[1], [0], [0], [1], [0, 0, 1, 1], [], []>} : vector<8x32xf32>, vector<32x32xf32>, vector<8x32xf32> -> vector<8x32xf32>
    %109 = arith.addf %107, %108 : vector<8x32xf32>
    %110 = arith.negf %109 : vector<8x32xf32>
    %111 = math.exp %110 : vector<8x32xf32>
    %cst_59 = arith.constant 1.000000e+00 : f32
    %112 = vector.broadcast %cst_59 : f32 to vector<8x32xf32>
    %113 = arith.addf %112, %111 : vector<8x32xf32>
    %114 = arith.divf %112, %113 : vector<8x32xf32>
    %115 = vector.extract_strided_slice %14 {offsets = [16, 0], sizes = [8, 32], strides = [1, 1]} : vector<64x32xf32> to vector<8x32xf32>
    %cst_60 = arith.constant dense<0.000000e+00> : vector<8x32xf32>
    %116 = tpu.matmul %105, %32, %cst_60 {dimension_numbers = #tpu.dot_dimension_numbers<[1], [0], [0], [1], [0, 0, 1, 1], [], []>} : vector<8x32xf32>, vector<32x32xf32>, vector<8x32xf32> -> vector<8x32xf32>
    %117 = arith.addf %115, %116 : vector<8x32xf32>
    %118 = arith.negf %117 : vector<8x32xf32>
    %119 = math.exp %118 : vector<8x32xf32>
    %cst_61 = arith.constant 1.000000e+00 : f32
    %120 = vector.broadcast %cst_61 : f32 to vector<8x32xf32>
    %121 = arith.addf %120, %119 : vector<8x32xf32>
    %122 = arith.divf %120, %121 : vector<8x32xf32>
    %123 = vector.extract_strided_slice %21 {offsets = [16, 0], sizes = [8, 32], strides = [1, 1]} : vector<64x32xf32> to vector<8x32xf32>
    %cst_62 = arith.constant dense<0.000000e+00> : vector<8x32xf32>
    %124 = tpu.matmul %105, %34, %cst_62 {dimension_numbers = #tpu.dot_dimension_numbers<[1], [0], [0], [1], [0, 0, 1, 1], [], []>} : vector<8x32xf32>, vector<32x32xf32>, vector<8x32xf32> -> vector<8x32xf32>
    %125 = arith.addf %123, %124 : vector<8x32xf32>
    %126 = math.tanh %125 : vector<8x32xf32>
    %127 = vector.extract_strided_slice %28 {offsets = [16, 0], sizes = [8, 32], strides = [1, 1]} : vector<64x32xf32> to vector<8x32xf32>
    %cst_63 = arith.constant dense<0.000000e+00> : vector<8x32xf32>
    %128 = tpu.matmul %105, %36, %cst_63 {dimension_numbers = #tpu.dot_dimension_numbers<[1], [0], [0], [1], [0, 0, 1, 1], [], []>} : vector<8x32xf32>, vector<32x32xf32>, vector<8x32xf32> -> vector<8x32xf32>
    %129 = arith.addf %127, %128 : vector<8x32xf32>
    %130 = arith.negf %129 : vector<8x32xf32>
    %131 = math.exp %130 : vector<8x32xf32>
    %cst_64 = arith.constant 1.000000e+00 : f32
    %132 = vector.broadcast %cst_64 : f32 to vector<8x32xf32>
    %133 = arith.addf %132, %131 : vector<8x32xf32>
    %134 = arith.divf %132, %133 : vector<8x32xf32>
    %135 = arith.mulf %122, %103 : vector<8x32xf32>
    %136 = arith.mulf %114, %126 : vector<8x32xf32>
    %137 = arith.addf %135, %136 : vector<8x32xf32>
    %138 = math.tanh %137 : vector<8x32xf32>
    %139 = arith.mulf %134, %138 : vector<8x32xf32>
    %c16 = arith.constant 16 : index
    %c0_65 = arith.constant 0 : index
    %140 = vector.load %arg11[%c16, %c0_65] : memref<64x32xf32, #tpu.memory_space<vmem>>, vector<8x32xf32>
    tpu.vector_store %arg11[%c16, %c0_65], %139 {strides = array<i32>} : memref<64x32xf32, #tpu.memory_space<vmem>>, vector<8x32xf32>,
    %141 = vector.extract_strided_slice %7 {offsets = [24, 0], sizes = [8, 32], strides = [1, 1]} : vector<64x32xf32> to vector<8x32xf32>
    %cst_66 = arith.constant dense<0.000000e+00> : vector<8x32xf32>
    %142 = tpu.matmul %139, %30, %cst_66 {dimension_numbers = #tpu.dot_dimension_numbers<[1], [0], [0], [1], [0, 0, 1, 1], [], []>} : vector<8x32xf32>, vector<32x32xf32>, vector<8x32xf32> -> vector<8x32xf32>
    %143 = arith.addf %141, %142 : vector<8x32xf32>
    %144 = arith.negf %143 : vector<8x32xf32>
    %145 = math.exp %144 : vector<8x32xf32>
    %cst_67 = arith.constant 1.000000e+00 : f32
    %146 = vector.broadcast %cst_67 : f32 to vector<8x32xf32>
    %147 = arith.addf %146, %145 : vector<8x32xf32>
    %148 = arith.divf %146, %147 : vector<8x32xf32>
    %149 = vector.extract_strided_slice %14 {offsets = [24, 0], sizes = [8, 32], strides = [1, 1]} : vector<64x32xf32> to vector<8x32xf32>
    %cst_68 = arith.constant dense<0.000000e+00> : vector<8x32xf32>
    %150 = tpu.matmul %139, %32, %cst_68 {dimension_numbers = #tpu.dot_dimension_numbers<[1], [0], [0], [1], [0, 0, 1, 1], [], []>} : vector<8x32xf32>, vector<32x32xf32>, vector<8x32xf32> -> vector<8x32xf32>
    %151 = arith.addf %149, %150 : vector<8x32xf32>
    %152 = arith.negf %151 : vector<8x32xf32>
    %153 = math.exp %152 : vector<8x32xf32>
    %cst_69 = arith.constant 1.000000e+00 : f32
    %154 = vector.broadcast %cst_69 : f32 to vector<8x32xf32>
    %155 = arith.addf %154, %153 : vector<8x32xf32>
    %156 = arith.divf %154, %155 : vector<8x32xf32>
    %157 = vector.extract_strided_slice %21 {offsets = [24, 0], sizes = [8, 32], strides = [1, 1]} : vector<64x32xf32> to vector<8x32xf32>
    %cst_70 = arith.constant dense<0.000000e+00> : vector<8x32xf32>
    %158 = tpu.matmul %139, %34, %cst_70 {dimension_numbers = #tpu.dot_dimension_numbers<[1], [0], [0], [1], [0, 0, 1, 1], [], []>} : vector<8x32xf32>, vector<32x32xf32>, vector<8x32xf32> -> vector<8x32xf32>
    %159 = arith.addf %157, %158 : vector<8x32xf32>
    %160 = math.tanh %159 : vector<8x32xf32>
    %161 = vector.extract_strided_slice %28 {offsets = [24, 0], sizes = [8, 32], strides = [1, 1]} : vector<64x32xf32> to vector<8x32xf32>
    %cst_71 = arith.constant dense<0.000000e+00> : vector<8x32xf32>
    %162 = tpu.matmul %139, %36, %cst_71 {dimension_numbers = #tpu.dot_dimension_numbers<[1], [0], [0], [1], [0, 0, 1, 1], [], []>} : vector<8x32xf32>, vector<32x32xf32>, vector<8x32xf32> -> vector<8x32xf32>
    %163 = arith.addf %161, %162 : vector<8x32xf32>
    %164 = arith.negf %163 : vector<8x32xf32>
    %165 = math.exp %164 : vector<8x32xf32>
    %cst_72 = arith.constant 1.000000e+00 : f32
    %166 = vector.broadcast %cst_72 : f32 to vector<8x32xf32>
    %167 = arith.addf %166, %165 : vector<8x32xf32>
    %168 = arith.divf %166, %167 : vector<8x32xf32>
    %169 = arith.mulf %156, %137 : vector<8x32xf32>
    %170 = arith.mulf %148, %160 : vector<8x32xf32>
    %171 = arith.addf %169, %170 : vector<8x32xf32>
    %172 = math.tanh %171 : vector<8x32xf32>
    %173 = arith.mulf %168, %172 : vector<8x32xf32>
    %c24 = arith.constant 24 : index
    %c0_73 = arith.constant 0 : index
    %174 = vector.load %arg11[%c24, %c0_73] : memref<64x32xf32, #tpu.memory_space<vmem>>, vector<8x32xf32>
    tpu.vector_store %arg11[%c24, %c0_73], %173 {strides = array<i32>} : memref<64x32xf32, #tpu.memory_space<vmem>>, vector<8x32xf32>,
    %175 = vector.extract_strided_slice %7 {offsets = [32, 0], sizes = [8, 32], strides = [1, 1]} : vector<64x32xf32> to vector<8x32xf32>
    %cst_74 = arith.constant dense<0.000000e+00> : vector<8x32xf32>
    %176 = tpu.matmul %173, %30, %cst_74 {dimension_numbers = #tpu.dot_dimension_numbers<[1], [0], [0], [1], [0, 0, 1, 1], [], []>} : vector<8x32xf32>, vector<32x32xf32>, vector<8x32xf32> -> vector<8x32xf32>
    %177 = arith.addf %175, %176 : vector<8x32xf32>
    %178 = arith.negf %177 : vector<8x32xf32>
    %179 = math.exp %178 : vector<8x32xf32>
    %cst_75 = arith.constant 1.000000e+00 : f32
    %180 = vector.broadcast %cst_75 : f32 to vector<8x32xf32>
    %181 = arith.addf %180, %179 : vector<8x32xf32>
    %182 = arith.divf %180, %181 : vector<8x32xf32>
    %183 = vector.extract_strided_slice %14 {offsets = [32, 0], sizes = [8, 32], strides = [1, 1]} : vector<64x32xf32> to vector<8x32xf32>
    %cst_76 = arith.constant dense<0.000000e+00> : vector<8x32xf32>
    %184 = tpu.matmul %173, %32, %cst_76 {dimension_numbers = #tpu.dot_dimension_numbers<[1], [0], [0], [1], [0, 0, 1, 1], [], []>} : vector<8x32xf32>, vector<32x32xf32>, vector<8x32xf32> -> vector<8x32xf32>
    %185 = arith.addf %183, %184 : vector<8x32xf32>
    %186 = arith.negf %185 : vector<8x32xf32>
    %187 = math.exp %186 : vector<8x32xf32>
    %cst_77 = arith.constant 1.000000e+00 : f32
    %188 = vector.broadcast %cst_77 : f32 to vector<8x32xf32>
    %189 = arith.addf %188, %187 : vector<8x32xf32>
    %190 = arith.divf %188, %189 : vector<8x32xf32>
    %191 = vector.extract_strided_slice %21 {offsets = [32, 0], sizes = [8, 32], strides = [1, 1]} : vector<64x32xf32> to vector<8x32xf32>
    %cst_78 = arith.constant dense<0.000000e+00> : vector<8x32xf32>
    %192 = tpu.matmul %173, %34, %cst_78 {dimension_numbers = #tpu.dot_dimension_numbers<[1], [0], [0], [1], [0, 0, 1, 1], [], []>} : vector<8x32xf32>, vector<32x32xf32>, vector<8x32xf32> -> vector<8x32xf32>
    %193 = arith.addf %191, %192 : vector<8x32xf32>
    %194 = math.tanh %193 : vector<8x32xf32>
    %195 = vector.extract_strided_slice %28 {offsets = [32, 0], sizes = [8, 32], strides = [1, 1]} : vector<64x32xf32> to vector<8x32xf32>
    %cst_79 = arith.constant dense<0.000000e+00> : vector<8x32xf32>
    %196 = tpu.matmul %173, %36, %cst_79 {dimension_numbers = #tpu.dot_dimension_numbers<[1], [0], [0], [1], [0, 0, 1, 1], [], []>} : vector<8x32xf32>, vector<32x32xf32>, vector<8x32xf32> -> vector<8x32xf32>
    %197 = arith.addf %195, %196 : vector<8x32xf32>
    %198 = arith.negf %197 : vector<8x32xf32>
    %199 = math.exp %198 : vector<8x32xf32>
    %cst_80 = arith.constant 1.000000e+00 : f32
    %200 = vector.broadcast %cst_80 : f32 to vector<8x32xf32>
    %201 = arith.addf %200, %199 : vector<8x32xf32>
    %202 = arith.divf %200, %201 : vector<8x32xf32>
    %203 = arith.mulf %190, %171 : vector<8x32xf32>
    %204 = arith.mulf %182, %194 : vector<8x32xf32>
    %205 = arith.addf %203, %204 : vector<8x32xf32>
    %206 = math.tanh %205 : vector<8x32xf32>
    %207 = arith.mulf %202, %206 : vector<8x32xf32>
    %c32 = arith.constant 32 : index
    %c0_81 = arith.constant 0 : index
    %208 = vector.load %arg11[%c32, %c0_81] : memref<64x32xf32, #tpu.memory_space<vmem>>, vector<8x32xf32>
    tpu.vector_store %arg11[%c32, %c0_81], %207 {strides = array<i32>} : memref<64x32xf32, #tpu.memory_space<vmem>>, vector<8x32xf32>,
    %209 = vector.extract_strided_slice %7 {offsets = [40, 0], sizes = [8, 32], strides = [1, 1]} : vector<64x32xf32> to vector<8x32xf32>
    %cst_82 = arith.constant dense<0.000000e+00> : vector<8x32xf32>
    %210 = tpu.matmul %207, %30, %cst_82 {dimension_numbers = #tpu.dot_dimension_numbers<[1], [0], [0], [1], [0, 0, 1, 1], [], []>} : vector<8x32xf32>, vector<32x32xf32>, vector<8x32xf32> -> vector<8x32xf32>
    %211 = arith.addf %209, %210 : vector<8x32xf32>
    %212 = arith.negf %211 : vector<8x32xf32>
    %213 = math.exp %212 : vector<8x32xf32>
    %cst_83 = arith.constant 1.000000e+00 : f32
    %214 = vector.broadcast %cst_83 : f32 to vector<8x32xf32>
    %215 = arith.addf %214, %213 : vector<8x32xf32>
    %216 = arith.divf %214, %215 : vector<8x32xf32>
    %217 = vector.extract_strided_slice %14 {offsets = [40, 0], sizes = [8, 32], strides = [1, 1]} : vector<64x32xf32> to vector<8x32xf32>
    %cst_84 = arith.constant dense<0.000000e+00> : vector<8x32xf32>
    %218 = tpu.matmul %207, %32, %cst_84 {dimension_numbers = #tpu.dot_dimension_numbers<[1], [0], [0], [1], [0, 0, 1, 1], [], []>} : vector<8x32xf32>, vector<32x32xf32>, vector<8x32xf32> -> vector<8x32xf32>
    %219 = arith.addf %217, %218 : vector<8x32xf32>
    %220 = arith.negf %219 : vector<8x32xf32>
    %221 = math.exp %220 : vector<8x32xf32>
    %cst_85 = arith.constant 1.000000e+00 : f32
    %222 = vector.broadcast %cst_85 : f32 to vector<8x32xf32>
    %223 = arith.addf %222, %221 : vector<8x32xf32>
    %224 = arith.divf %222, %223 : vector<8x32xf32>
    %225 = vector.extract_strided_slice %21 {offsets = [40, 0], sizes = [8, 32], strides = [1, 1]} : vector<64x32xf32> to vector<8x32xf32>
    %cst_86 = arith.constant dense<0.000000e+00> : vector<8x32xf32>
    %226 = tpu.matmul %207, %34, %cst_86 {dimension_numbers = #tpu.dot_dimension_numbers<[1], [0], [0], [1], [0, 0, 1, 1], [], []>} : vector<8x32xf32>, vector<32x32xf32>, vector<8x32xf32> -> vector<8x32xf32>
    %227 = arith.addf %225, %226 : vector<8x32xf32>
    %228 = math.tanh %227 : vector<8x32xf32>
    %229 = vector.extract_strided_slice %28 {offsets = [40, 0], sizes = [8, 32], strides = [1, 1]} : vector<64x32xf32> to vector<8x32xf32>
    %cst_87 = arith.constant dense<0.000000e+00> : vector<8x32xf32>
    %230 = tpu.matmul %207, %36, %cst_87 {dimension_numbers = #tpu.dot_dimension_numbers<[1], [0], [0], [1], [0, 0, 1, 1], [], []>} : vector<8x32xf32>, vector<32x32xf32>, vector<8x32xf32> -> vector<8x32xf32>
    %231 = arith.addf %229, %230 : vector<8x32xf32>
    %232 = arith.negf %231 : vector<8x32xf32>
    %233 = math.exp %232 : vector<8x32xf32>
    %cst_88 = arith.constant 1.000000e+00 : f32
    %234 = vector.broadcast %cst_88 : f32 to vector<8x32xf32>
    %235 = arith.addf %234, %233 : vector<8x32xf32>
    %236 = arith.divf %234, %235 : vector<8x32xf32>
    %237 = arith.mulf %224, %205 : vector<8x32xf32>
    %238 = arith.mulf %216, %228 : vector<8x32xf32>
    %239 = arith.addf %237, %238 : vector<8x32xf32>
    %240 = math.tanh %239 : vector<8x32xf32>
    %241 = arith.mulf %236, %240 : vector<8x32xf32>
    %c40 = arith.constant 40 : index
    %c0_89 = arith.constant 0 : index
    %242 = vector.load %arg11[%c40, %c0_89] : memref<64x32xf32, #tpu.memory_space<vmem>>, vector<8x32xf32>
    tpu.vector_store %arg11[%c40, %c0_89], %241 {strides = array<i32>} : memref<64x32xf32, #tpu.memory_space<vmem>>, vector<8x32xf32>,
    %243 = vector.extract_strided_slice %7 {offsets = [48, 0], sizes = [8, 32], strides = [1, 1]} : vector<64x32xf32> to vector<8x32xf32>
    %cst_90 = arith.constant dense<0.000000e+00> : vector<8x32xf32>
    %244 = tpu.matmul %241, %30, %cst_90 {dimension_numbers = #tpu.dot_dimension_numbers<[1], [0], [0], [1], [0, 0, 1, 1], [], []>} : vector<8x32xf32>, vector<32x32xf32>, vector<8x32xf32> -> vector<8x32xf32>
    %245 = arith.addf %243, %244 : vector<8x32xf32>
    %246 = arith.negf %245 : vector<8x32xf32>
    %247 = math.exp %246 : vector<8x32xf32>
    %cst_91 = arith.constant 1.000000e+00 : f32
    %248 = vector.broadcast %cst_91 : f32 to vector<8x32xf32>
    %249 = arith.addf %248, %247 : vector<8x32xf32>
    %250 = arith.divf %248, %249 : vector<8x32xf32>
    %251 = vector.extract_strided_slice %14 {offsets = [48, 0], sizes = [8, 32], strides = [1, 1]} : vector<64x32xf32> to vector<8x32xf32>
    %cst_92 = arith.constant dense<0.000000e+00> : vector<8x32xf32>
    %252 = tpu.matmul %241, %32, %cst_92 {dimension_numbers = #tpu.dot_dimension_numbers<[1], [0], [0], [1], [0, 0, 1, 1], [], []>} : vector<8x32xf32>, vector<32x32xf32>, vector<8x32xf32> -> vector<8x32xf32>
    %253 = arith.addf %251, %252 : vector<8x32xf32>
    %254 = arith.negf %253 : vector<8x32xf32>
    %255 = math.exp %254 : vector<8x32xf32>
    %cst_93 = arith.constant 1.000000e+00 : f32
    %256 = vector.broadcast %cst_93 : f32 to vector<8x32xf32>
    %257 = arith.addf %256, %255 : vector<8x32xf32>
    %258 = arith.divf %256, %257 : vector<8x32xf32>
    %259 = vector.extract_strided_slice %21 {offsets = [48, 0], sizes = [8, 32], strides = [1, 1]} : vector<64x32xf32> to vector<8x32xf32>
    %cst_94 = arith.constant dense<0.000000e+00> : vector<8x32xf32>
    %260 = tpu.matmul %241, %34, %cst_94 {dimension_numbers = #tpu.dot_dimension_numbers<[1], [0], [0], [1], [0, 0, 1, 1], [], []>} : vector<8x32xf32>, vector<32x32xf32>, vector<8x32xf32> -> vector<8x32xf32>
    %261 = arith.addf %259, %260 : vector<8x32xf32>
    %262 = math.tanh %261 : vector<8x32xf32>
    %263 = vector.extract_strided_slice %28 {offsets = [48, 0], sizes = [8, 32], strides = [1, 1]} : vector<64x32xf32> to vector<8x32xf32>
    %cst_95 = arith.constant dense<0.000000e+00> : vector<8x32xf32>
    %264 = tpu.matmul %241, %36, %cst_95 {dimension_numbers = #tpu.dot_dimension_numbers<[1], [0], [0], [1], [0, 0, 1, 1], [], []>} : vector<8x32xf32>, vector<32x32xf32>, vector<8x32xf32> -> vector<8x32xf32>
    %265 = arith.addf %263, %264 : vector<8x32xf32>
    %266 = arith.negf %265 : vector<8x32xf32>
    %267 = math.exp %266 : vector<8x32xf32>
    %cst_96 = arith.constant 1.000000e+00 : f32
    %268 = vector.broadcast %cst_96 : f32 to vector<8x32xf32>
    %269 = arith.addf %268, %267 : vector<8x32xf32>
    %270 = arith.divf %268, %269 : vector<8x32xf32>
    %271 = arith.mulf %258, %239 : vector<8x32xf32>
    %272 = arith.mulf %250, %262 : vector<8x32xf32>
    %273 = arith.addf %271, %272 : vector<8x32xf32>
    %274 = math.tanh %273 : vector<8x32xf32>
    %275 = arith.mulf %270, %274 : vector<8x32xf32>
    %c48 = arith.constant 48 : index
    %c0_97 = arith.constant 0 : index
    %276 = vector.load %arg11[%c48, %c0_97] : memref<64x32xf32, #tpu.memory_space<vmem>>, vector<8x32xf32>
    tpu.vector_store %arg11[%c48, %c0_97], %275 {strides = array<i32>} : memref<64x32xf32, #tpu.memory_space<vmem>>, vector<8x32xf32>,
    %277 = vector.extract_strided_slice %7 {offsets = [56, 0], sizes = [8, 32], strides = [1, 1]} : vector<64x32xf32> to vector<8x32xf32>
    %cst_98 = arith.constant dense<0.000000e+00> : vector<8x32xf32>
    %278 = tpu.matmul %275, %30, %cst_98 {dimension_numbers = #tpu.dot_dimension_numbers<[1], [0], [0], [1], [0, 0, 1, 1], [], []>} : vector<8x32xf32>, vector<32x32xf32>, vector<8x32xf32> -> vector<8x32xf32>
    %279 = arith.addf %277, %278 : vector<8x32xf32>
    %280 = arith.negf %279 : vector<8x32xf32>
    %281 = math.exp %280 : vector<8x32xf32>
    %cst_99 = arith.constant 1.000000e+00 : f32
    %282 = vector.broadcast %cst_99 : f32 to vector<8x32xf32>
    %283 = arith.addf %282, %281 : vector<8x32xf32>
    %284 = arith.divf %282, %283 : vector<8x32xf32>
    %285 = vector.extract_strided_slice %14 {offsets = [56, 0], sizes = [8, 32], strides = [1, 1]} : vector<64x32xf32> to vector<8x32xf32>
    %cst_100 = arith.constant dense<0.000000e+00> : vector<8x32xf32>
    %286 = tpu.matmul %275, %32, %cst_100 {dimension_numbers = #tpu.dot_dimension_numbers<[1], [0], [0], [1], [0, 0, 1, 1], [], []>} : vector<8x32xf32>, vector<32x32xf32>, vector<8x32xf32> -> vector<8x32xf32>
    %287 = arith.addf %285, %286 : vector<8x32xf32>
    %288 = arith.negf %287 : vector<8x32xf32>
    %289 = math.exp %288 : vector<8x32xf32>
    %cst_101 = arith.constant 1.000000e+00 : f32
    %290 = vector.broadcast %cst_101 : f32 to vector<8x32xf32>
    %291 = arith.addf %290, %289 : vector<8x32xf32>
    %292 = arith.divf %290, %291 : vector<8x32xf32>
    %293 = vector.extract_strided_slice %21 {offsets = [56, 0], sizes = [8, 32], strides = [1, 1]} : vector<64x32xf32> to vector<8x32xf32>
    %cst_102 = arith.constant dense<0.000000e+00> : vector<8x32xf32>
    %294 = tpu.matmul %275, %34, %cst_102 {dimension_numbers = #tpu.dot_dimension_numbers<[1], [0], [0], [1], [0, 0, 1, 1], [], []>} : vector<8x32xf32>, vector<32x32xf32>, vector<8x32xf32> -> vector<8x32xf32>
    %295 = arith.addf %293, %294 : vector<8x32xf32>
    %296 = math.tanh %295 : vector<8x32xf32>
    %297 = vector.extract_strided_slice %28 {offsets = [56, 0], sizes = [8, 32], strides = [1, 1]} : vector<64x32xf32> to vector<8x32xf32>
    %cst_103 = arith.constant dense<0.000000e+00> : vector<8x32xf32>
    %298 = tpu.matmul %275, %36, %cst_103 {dimension_numbers = #tpu.dot_dimension_numbers<[1], [0], [0], [1], [0, 0, 1, 1], [], []>} : vector<8x32xf32>, vector<32x32xf32>, vector<8x32xf32> -> vector<8x32xf32>
    %299 = arith.addf %297, %298 : vector<8x32xf32>
    %300 = arith.negf %299 : vector<8x32xf32>
    %301 = math.exp %300 : vector<8x32xf32>
    %cst_104 = arith.constant 1.000000e+00 : f32
    %302 = vector.broadcast %cst_104 : f32 to vector<8x32xf32>
    %303 = arith.addf %302, %301 : vector<8x32xf32>
    %304 = arith.divf %302, %303 : vector<8x32xf32>
    %305 = arith.mulf %292, %273 : vector<8x32xf32>
    %306 = arith.mulf %284, %296 : vector<8x32xf32>
    %307 = arith.addf %305, %306 : vector<8x32xf32>
    %308 = math.tanh %307 : vector<8x32xf32>
    %309 = arith.mulf %304, %308 : vector<8x32xf32>
    %c56 = arith.constant 56 : index
    %c0_105 = arith.constant 0 : index
    %310 = vector.load %arg11[%c56, %c0_105] : memref<64x32xf32, #tpu.memory_space<vmem>>, vector<8x32xf32>
    tpu.vector_store %arg11[%c56, %c0_105], %309 {strides = array<i32>} : memref<64x32xf32, #tpu.memory_space<vmem>>, vector<8x32xf32>,
    %c0_106 = arith.constant 0 : index
    %c0_107 = arith.constant 0 : index
    %311 = vector.load %arg9[%c0_106, %c0_107] : memref<8x32xf32, #tpu.memory_space<vmem>>, vector<8x32xf32>
    tpu.vector_store %arg9[%c0_106, %c0_107], %309 {strides = array<i32>} : memref<8x32xf32, #tpu.memory_space<vmem>>, vector<8x32xf32>,
    %c0_108 = arith.constant 0 : index
    %c0_109 = arith.constant 0 : index
    %312 = vector.load %arg10[%c0_108, %c0_109] : memref<8x32xf32, #tpu.memory_space<vmem>>, vector<8x32xf32>
    tpu.vector_store %arg10[%c0_108, %c0_109], %307 {strides = array<i32>} : memref<8x32xf32, #tpu.memory_space<vmem>>, vector<8x32xf32>,
    %c0_110 = arith.constant 0 : index
    %c0_111 = arith.constant 0 : index
    %313 = vector.load %arg11[%c0_110, %c0_111] : memref<64x32xf32, #tpu.memory_space<vmem>>, vector<64x32xf32>
    %c0_112 = arith.constant 0 : index
    %c0_113 = arith.constant 0 : index
    %314 = vector.load %arg6[%c0_112, %c0_113] : memref<32x4xf32, #tpu.memory_space<vmem>>, vector<32x4xf32>
    %cst_114 = arith.constant dense<0.000000e+00> : vector<64x4xf32>
    %315 = tpu.matmul %313, %314, %cst_114 {dimension_numbers = #tpu.dot_dimension_numbers<[1], [0], [0], [1], [0, 0, 1, 1], [], []>} : vector<64x32xf32>, vector<32x4xf32>, vector<64x4xf32> -> vector<64x4xf32>
    %c0_115 = arith.constant 0 : index
    %c0_116 = arith.constant 0 : index
    %316 = vector.load %arg7[%c0_115, %c0_116] : memref<1x4xf32, #tpu.memory_space<vmem>>, vector<1x4xf32>
    %317 = vector.broadcast %316 : vector<1x4xf32> to vector<64x4xf32>
    %318 = arith.addf %315, %317 : vector<64x4xf32>
    %c0_117 = arith.constant 0 : index
    %c0_118 = arith.constant 0 : index
    %319 = vector.load %arg8[%c0_117, %c0_118] : memref<64x4xf32, #tpu.memory_space<vmem>>, vector<64x4xf32>
    tpu.vector_store %arg8[%c0_117, %c0_118], %318 {strides = array<i32>} : memref<64x4xf32, #tpu.memory_space<vmem>>, vector<64x4xf32>,
    return
  }
}

</mosaic_0001>

<llo_original>
// kernel: teprnn_forward.1
$region0: #{teprnn_forward.1}
  #allocation0 [shape = 'u32[]', space=smem, size = 0x4, offset = 0x4, fixed_abs, tag = 'smem constant byte address 0x4 - core index']
  #allocation1 [shape = 'u32[72,128]{1,0:T(1,128)}', space=vmem, size = 0x9000, scoped, tag = 'internal scratch']
  #allocation2 [shape = 'f32[64,32]{1,0:T(8,128)}', space=vmem, size = 0x8000, scoped, tag = 'scratch operand']
  %s0 = inlined_call_operand.vmem [shape: f32[64,4], index: 0, kind: input, shape index: {}]
  %s1 = inlined_call_operand.vmem [shape: f32[8,32], index: 1, kind: input, shape index: {}]
  %s2 = inlined_call_operand.vmem [shape: f32[8,32], index: 2, kind: input, shape index: {}]
  %s3 = inlined_call_operand.hbm [shape: f32[4,4,32], index: 3, kind: input, shape index: {}]
  %s4 = inlined_call_operand.vmem [shape: f32[4,32,32], index: 4, kind: input, shape index: {}]
  %s5 = inlined_call_operand.vmem [shape: f32[4,1,32], index: 5, kind: input, shape index: {}]
  %s6 = inlined_call_operand.vmem [shape: f32[32,4], index: 6, kind: input, shape index: {}]
  %s7 = inlined_call_operand.vmem [shape: f32[1,4], index: 7, kind: input, shape index: {}]
  %s8 = inlined_call_operand.vmem [shape: f32[64,4], index: 8, kind: output, shape index: {0}]
  %s9 = inlined_call_operand.vmem [shape: f32[8,32], index: 9, kind: output, shape index: {1}]
  %s10 = inlined_call_operand.vmem [shape: f32[8,32], index: 10, kind: output, shape index: {2}]
  %11 = xla_tuple %s8, %s9, %s10
  %s12 = sld [smem:[#allocation0]]
  $region62: #{teprnn_forward.1} parent=0
    _
  %s14 = ssub.s32 1, %s12
  %s15 = scalar_select 0, %s14, %s12
  $region1: #{teprnn_forward.1} parent=0
    #allocation3 [shape = 'u8[8192]{0}', space=vmem, size = 0x2000, scoped, tag = 'input window, operand 3, single buffered']
    #allocation4 [shape = 's32[1]{0}', space=sflag, size = 0x4, scoped, tag = 'scoped memory for teprnn_forward.1']
    %16 = vsyncpa [#allocation4], 0
    // Predicated region
    $region2: #{teprnn_forward.1} parent=1 // pred_check
      _
    $region3: #{teprnn_forward.1} parent=1 // pred_check_branch
      %18 = sbr.rel (0) target = $region5
    $region4: #{teprnn_forward.1} parent=1 // pred_region
      _
    $region5: #{teprnn_forward.1} parent=1 // pred_fallthru
      _
    // Predicated region
    $region6: #{teprnn_forward.1} parent=1 // pred_check
      _
    $region7: #{teprnn_forward.1} parent=1 // pred_check_branch
      %20 = sbr.rel (0) target = $region9
    $region8: #{teprnn_forward.1} parent=1 // pred_region
      _
    $region9: #{teprnn_forward.1} parent=1 // pred_fallthru
      _
    // Predicated region
    $region10: #{teprnn_forward.1} parent=1 // pred_check
      _
    $region11: #{teprnn_forward.1} parent=1 // pred_check_branch
      %22 = sbr.rel (0) target = $region13
    $region12: #{teprnn_forward.1} parent=1 // pred_region
      _
    $region13: #{teprnn_forward.1} parent=1 // pred_fallthru
      _
    // Predicated region
    $region14: #{teprnn_forward.1} parent=1 // pred_check
      _
    $region15: #{teprnn_forward.1} parent=1 // pred_check_branch
      %24 = sbr.rel (0) target = $region17
    $region16: #{teprnn_forward.1} parent=1 // pred_region
      %26 = vsyncadd [#allocation4], 0
      %s27 = sshll.u32 %s3, 4
      %s28 = int_to_ptr.hbm [resolvable:$true] %s27
      %s29 = sshll.u32 [#allocation3], 4
      %s30 = int_to_ptr.vmem [resolvable:$true] %s29
      %35 = dma.hbm_to_vmem [thread:$0]  %s28, 256, %s30, [#allocation4], 64, 64, 4
    $region17: #{teprnn_forward.1} parent=1 // pred_fallthru
      _
    // Predicated region
    $region18: #{teprnn_forward.1} parent=1 // pred_check
      _
    $region19: #{teprnn_forward.1} parent=1 // pred_check_branch
      %37 = sbr.rel (0) target = $region21
    $region20: #{teprnn_forward.1} parent=1 // pred_region
      _
    $region21: #{teprnn_forward.1} parent=1 // pred_fallthru
      _
    // Predicated region
    $region22: #{teprnn_forward.1} parent=1 // pred_check
      _
    $region23: #{teprnn_forward.1} parent=1 // pred_check_branch
      %39 = sbr.rel (0) target = $region25
    $region24: #{teprnn_forward.1} parent=1 // pred_region
      _
    $region25: #{teprnn_forward.1} parent=1 // pred_fallthru
      _
    // Predicated region
    $region26: #{teprnn_forward.1} parent=1 // pred_check
      _
    $region27: #{teprnn_forward.1} parent=1 // pred_check_branch
      %41 = sbr.rel (0) target = $region29
    $region28: #{teprnn_forward.1} parent=1 // pred_region
      _
    $region29: #{teprnn_forward.1} parent=1 // pred_fallthru
      _
    // Predicated region
    $region30: #{teprnn_forward.1} parent=1 // pred_check
      _
    $region31: #{teprnn_forward.1} parent=1 // pred_check_branch
      %43 = sbr.rel (0) target = $region33
    $region32: #{teprnn_forward.1} parent=1 // pred_region
      _
    $region33: #{teprnn_forward.1} parent=1 // pred_fallthru
      _
    // Predicated region
    $region34: #{teprnn_forward.1} parent=1 // pred_check
      _
    $region35: #{teprnn_forward.1} parent=1 // pred_check_branch
      %45 = sbr.rel (0) target = $region37
    $region36: #{teprnn_forward.1} parent=1 // pred_region
      %47 = dma.done [#allocation4], 256
    $region37: #{teprnn_forward.1} parent=1 // pred_fallthru
      _
    %v48 = vld [vmem:[%s0] sm:$0xff]
    %v49 = vld [vmem:[%s0 + $0x8] sm:$0xff]
    %v50 = vld [vmem:[%s0 + $0x10] sm:$0xff]
    %v51 = vld [vmem:[%s0 + $0x18] sm:$0xff]
    %v52 = vld [vmem:[%s0 + $0x20] sm:$0xff]
    %v53 = vld [vmem:[%s0 + $0x28] sm:$0xff]
    %v54 = vld [vmem:[%s0 + $0x30] sm:$0xff]
    %v55 = vld [vmem:[%s0 + $0x38] sm:$0xff]
    %v56 = vld [vmem:[#allocation3] sm:$0xf]
    %v57 = vld [vmem:[%s5] sm:$0x1]
    %v59 = vperm.slane %v57, 0
    %vm61 = vcmask 31744
    %v63 = vsel %vm61, %v48, 0
    %v66 = vsel %vm61, %v49, 0
    %v69 = vsel %vm61, %v50, 0
    %v72 = vsel %vm61, %v51, 0
    %v75 = vsel %vm61, %v52, 0
    %v78 = vsel %vm61, %v53, 0
    %v81 = vsel %vm61, %v54, 0
    %v84 = vsel %vm61, %v55, 0
    %vm86 = vcmask 1043456
    %v88 = vsel %vm86, %v56, 0
    %90 = vmatpush.msra.mxu0 0.0
    %91 = vmatpush.msra.mxu0 0.0
    %92 = vmatpush.msra.mxu0 0.0
    %93 = vmatpush.msra.mxu0 0.0
    %94 = vmatpush.msra.mxu0 0.0
    %95 = vmatpush.msra.mxu0 0.0
    %96 = vmatpush.msra.mxu0 0.0
    %97 = vmatpush.msra.mxu0 0.0
    %98 = vmatpush.msra.mxu0 0.0
    %99 = vmatpush.msra.mxu0 0.0
    %100 = vmatpush.msra.mxu0 0.0
    %101 = vmatpush.msra.mxu0 0.0
    %102 = vmatpush.msra.mxu0 0.0
    %103 = vmatpush.msra.mxu0 0.0
    %104 = vmatpush.msra.mxu0 0.0
    %105 = vmatpush.msra.mxu0 %v88
    %106 = vmatmul.f32.gmra.mxu0 %v63
    %v107 = vpop.f32.mrf.mxu0
    %v108 = vadd.f32 %v59, %v107
    %109 = vmatmul.f32.gmra.mxu0 %v66
    %v110 = vpop.f32.mrf.mxu0
    %v111 = vadd.f32 %v59, %v110
    %112 = vmatmul.f32.gmra.mxu0 %v69
    %v113 = vpop.f32.mrf.mxu0
    %v114 = vadd.f32 %v59, %v113
    %115 = vmatmul.f32.gmra.mxu0 %v72
    %v116 = vpop.f32.mrf.mxu0
    %v117 = vadd.f32 %v59, %v116
    %118 = vmatmul.f32.gmra.mxu0 %v75
    %v119 = vpop.f32.mrf.mxu0
    %v120 = vadd.f32 %v59, %v119
    %121 = vmatmul.f32.gmra.mxu0 %v78
    %v122 = vpop.f32.mrf.mxu0
    %v123 = vadd.f32 %v59, %v122
    %124 = vmatmul.f32.gmra.mxu0 %v81
    %v125 = vpop.f32.mrf.mxu0
    %v126 = vadd.f32 %v59, %v125
    %127 = vmatmul.f32.gmra.mxu0 %v84
    %v128 = vpop.f32.mrf.mxu0
    %v129 = vadd.f32 %v59, %v128
    %130 = vdwg.mxu0
    %s131 = scalar_lea.vmem [#allocation3], 4
    %v132 = vld [vmem:[%s131] sm:$0xf]
    %s133 = scalar_lea.vmem %s5, 1
    %v134 = vld [vmem:[%s133] sm:$0x1]
    %v136 = vperm.slane %v134, 0
    %v139 = vsel %vm86, %v132, 0
    %141 = vmatpush.msra.mxu0 0.0
    %142 = vmatpush.msra.mxu0 0.0
    %143 = vmatpush.msra.mxu0 0.0
    %144 = vmatpush.msra.mxu0 0.0
    %145 = vmatpush.msra.mxu0 0.0
    %146 = vmatpush.msra.mxu0 0.0
    %147 = vmatpush.msra.mxu0 0.0
    %148 = vmatpush.msra.mxu0 0.0
    %149 = vmatpush.msra.mxu0 0.0
    %150 = vmatpush.msra.mxu0 0.0
    %151 = vmatpush.msra.mxu0 0.0
    %152 = vmatpush.msra.mxu0 0.0
    %153 = vmatpush.msra.mxu0 0.0
    %154 = vmatpush.msra.mxu0 0.0
    %155 = vmatpush.msra.mxu0 0.0
    %156 = vmatpush.msra.mxu0 %v139
    %157 = vmatmul.f32.gmra.mxu0 %v63
    %v158 = vpop.f32.mrf.mxu0
    %v159 = vadd.f32 %v136, %v158
    %160 = vmatmul.f32.gmra.mxu0 %v66
    %v161 = vpop.f32.mrf.mxu0
    %v162 = vadd.f32 %v136, %v161
    %163 = vmatmul.f32.gmra.mxu0 %v69
    %v164 = vpop.f32.mrf.mxu0
    %v165 = vadd.f32 %v136, %v164
    %166 = vmatmul.f32.gmra.mxu0 %v72
    %v167 = vpop.f32.mrf.mxu0
    %v168 = vadd.f32 %v136, %v167
    %169 = vmatmul.f32.gmra.mxu0 %v75
    %v170 = vpop.f32.mrf.mxu0
    %v171 = vadd.f32 %v136, %v170
    %172 = vmatmul.f32.gmra.mxu0 %v78
    %v173 = vpop.f32.mrf.mxu0
    %v174 = vadd.f32 %v136, %v173
    %175 = vmatmul.f32.gmra.mxu0 %v81
    %v176 = vpop.f32.mrf.mxu0
    %v177 = vadd.f32 %v136, %v176
    %178 = vmatmul.f32.gmra.mxu0 %v84
    %v179 = vpop.f32.mrf.mxu0
    %v180 = vadd.f32 %v136, %v179
    %181 = vdwg.mxu0
    %s182 = scalar_lea.vmem [#allocation3], 8
    %v183 = vld [vmem:[%s182] sm:$0xf]
    %s184 = scalar_lea.vmem %s5, 2
    %v185 = vld [vmem:[%s184] sm:$0x1]
    %v187 = vperm.slane %v185, 0
    %v190 = vsel %vm86, %v183, 0
    %192 = vmatpush.msra.mxu0 0.0
    %193 = vmatpush.msra.mxu0 0.0
    %194 = vmatpush.msra.mxu0 0.0
    %195 = vmatpush.msra.mxu0 0.0
    %196 = vmatpush.msra.mxu0 0.0
    %197 = vmatpush.msra.mxu0 0.0
    %198 = vmatpush.msra.mxu0 0.0
    %199 = vmatpush.msra.mxu0 0.0
    %200 = vmatpush.msra.mxu0 0.0
    %201 = vmatpush.msra.mxu0 0.0
    %202 = vmatpush.msra.mxu0 0.0
    %203 = vmatpush.msra.mxu0 0.0
    %204 = vmatpush.msra.mxu0 0.0
    %205 = vmatpush.msra.mxu0 0.0
    %206 = vmatpush.msra.mxu0 0.0
    %207 = vmatpush.msra.mxu0 %v190
    %208 = vmatmul.f32.gmra.mxu0 %v63
    %v209 = vpop.f32.mrf.mxu0
    %v210 = vadd.f32 %v187, %v209
    %211 = vmatmul.f32.gmra.mxu0 %v66
    %v212 = vpop.f32.mrf.mxu0
    %v213 = vadd.f32 %v187, %v212
    %214 = vmatmul.f32.gmra.mxu0 %v69
    %v215 = vpop.f32.mrf.mxu0
    %v216 = vadd.f32 %v187, %v215
    %217 = vmatmul.f32.gmra.mxu0 %v72
    %v218 = vpop.f32.mrf.mxu0
    %v219 = vadd.f32 %v187, %v218
    %220 = vmatmul.f32.gmra.mxu0 %v75
    %v221 = vpop.f32.mrf.mxu0
    %v222 = vadd.f32 %v187, %v221
    %223 = vmatmul.f32.gmra.mxu0 %v78
    %v224 = vpop.f32.mrf.mxu0
    %v225 = vadd.f32 %v187, %v224
    %226 = vmatmul.f32.gmra.mxu0 %v81
    %v227 = vpop.f32.mrf.mxu0
    %v228 = vadd.f32 %v187, %v227
    %229 = vmatmul.f32.gmra.mxu0 %v84
    %v230 = vpop.f32.mrf.mxu0
    %v231 = vadd.f32 %v187, %v230
    %232 = vdwg.mxu0
    %s233 = scalar_lea.vmem [#allocation3], 12
    %v234 = vld [vmem:[%s233] sm:$0xf]
    %s235 = scalar_lea.vmem %s5, 3
    %v236 = vld [vmem:[%s235] sm:$0x1]
    %v238 = vperm.slane %v236, 0
    %v241 = vsel %vm86, %v234, 0
    %243 = vmatpush.msra.mxu0 0.0
    %244 = vmatpush.msra.mxu0 0.0
    %245 = vmatpush.msra.mxu0 0.0
    %246 = vmatpush.msra.mxu0 0.0
    %247 = vmatpush.msra.mxu0 0.0
    %248 = vmatpush.msra.mxu0 0.0
    %249 = vmatpush.msra.mxu0 0.0
    %250 = vmatpush.msra.mxu0 0.0
    %251 = vmatpush.msra.mxu0 0.0
    %252 = vmatpush.msra.mxu0 0.0
    %253 = vmatpush.msra.mxu0 0.0
    %254 = vmatpush.msra.mxu0 0.0
    %255 = vmatpush.msra.mxu0 0.0
    %256 = vmatpush.msra.mxu0 0.0
    %257 = vmatpush.msra.mxu0 0.0
    %258 = vmatpush.msra.mxu0 %v241
    %259 = vmatmul.f32.gmra.mxu0 %v63
    %v260 = vpop.f32.mrf.mxu0
    %v261 = vadd.f32 %v238, %v260
    %262 = vmatmul.f32.gmra.mxu0 %v66
    %v263 = vpop.f32.mrf.mxu0
    %v264 = vadd.f32 %v238, %v263
    %265 = vmatmul.f32.gmra.mxu0 %v69
    %v266 = vpop.f32.mrf.mxu0
    %v267 = vadd.f32 %v238, %v266
    %268 = vmatmul.f32.gmra.mxu0 %v72
    %v269 = vpop.f32.mrf.mxu0
    %v270 = vadd.f32 %v238, %v269
    %271 = vmatmul.f32.gmra.mxu0 %v75
    %v272 = vpop.f32.mrf.mxu0
    %v273 = vadd.f32 %v238, %v272
    %274 = vmatmul.f32.gmra.mxu0 %v78
    %v275 = vpop.f32.mrf.mxu0
    %v276 = vadd.f32 %v238, %v275
    %277 = vmatmul.f32.gmra.mxu0 %v81
    %v278 = vpop.f32.mrf.mxu0
    %v279 = vadd.f32 %v238, %v278
    %280 = vmatmul.f32.gmra.mxu0 %v84
    %v281 = vpop.f32.mrf.mxu0
    %v282 = vadd.f32 %v238, %v281
    %283 = vdwg.mxu0
    %v284 = vld [vmem:[%s4] sm:$0xff]
    %v285 = vld [vmem:[%s4 + $0x8] sm:$0xff]
    %v286 = vld [vmem:[%s4 + $0x10] sm:$0xff]
    %v287 = vld [vmem:[%s4 + $0x18] sm:$0xff]
    %s288 = scalar_lea.vmem %s4, 32
    %v289 = vld [vmem:[%s288] sm:$0xff]
    %v290 = vld [vmem:[%s288 + $0x8] sm:$0xff]
    %v291 = vld [vmem:[%s288 + $0x10] sm:$0xff]
    %v292 = vld [vmem:[%s288 + $0x18] sm:$0xff]
    %s293 = scalar_lea.vmem %s4, 64
    %v294 = vld [vmem:[%s293] sm:$0xff]
    %v295 = vld [vmem:[%s293 + $0x8] sm:$0xff]
    %v296 = vld [vmem:[%s293 + $0x10] sm:$0xff]
    %v297 = vld [vmem:[%s293 + $0x18] sm:$0xff]
    %s298 = scalar_lea.vmem %s4, 96
    %v299 = vld [vmem:[%s298] sm:$0xff]
    %v300 = vld [vmem:[%s298 + $0x8] sm:$0xff]
    %v301 = vld [vmem:[%s298 + $0x10] sm:$0xff]
    %v302 = vld [vmem:[%s298 + $0x18] sm:$0xff]
    %v303 = vld [vmem:[%s1] sm:$0xff]
    %v304 = vld [vmem:[%s2] sm:$0xff]
    %vm305 = vcmask 261120
    %v307 = vsel %vm305, %v303, 0
    %309 = vmatpush.msra.mxu0 0.0
    %310 = vmatpush.msra.mxu0 0.0
    %311 = vmatpush.msra.mxu0 0.0
    %312 = vmatpush.msra.mxu0 0.0
    %313 = vmatpush.msra.mxu0 0.0
    %314 = vmatpush.msra.mxu0 0.0
    %315 = vmatpush.msra.mxu0 0.0
    %316 = vmatpush.msra.mxu0 0.0
    %317 = vmatpush.msra.mxu0 0.0
    %318 = vmatpush.msra.mxu0 0.0
    %319 = vmatpush.msra.mxu0 0.0
    %320 = vmatpush.msra.mxu0 0.0
    %321 = vmatpush.msra.mxu0 %v287
    %322 = vmatpush.msra.mxu0 %v286
    %323 = vmatpush.msra.mxu0 %v285
    %324 = vmatpush.msra.mxu0 %v284
    %325 = vmatmul.f32.gmra.mxu0 %v307
    %v326 = vpop.f32.mrf.mxu0
    %v327 = vadd.f32 0.0, %v326
    %328 = vdwg.mxu0
    %v329 = vadd.f32 %v108, %v327
    %v330 = vxor.u32 %v329, 2147483648
    %v331 = vmul.f32 %v330, 1.442695
    %v332 = vpow.pop %v331
    %v333 = vadd.f32 %v332, 1.0
    %v334 = vrcp.pop %v333
    %v335 = vmul.f32 %v333, %v334
    %v336 = vsub.f32 1.0, %v335
    %v337 = vmul.f32 %v334, %v336
    %v338 = vadd.f32 %v334, %v337
    %vm339 = vweird.f32 %v333
    %vm340 = vweird.f32 %v334
    %vm341 = vmor %vm339, %vm340
    %v342 = vsel %vm341, %v334, %v338
    %v343 = vand.u32 2147483647, %v333
    %vm344 = vcmp.eq.f32.partialorder %v343, 8.507059e+37
    %v345 = vand.u32 %v333, 2147483648
    %v346 = vor.u32 1.1754944e-38, %v345
    %v347 = vsel %vm344, %v346, %v342
    %v348 = vmul.f32 1.0, %v347
    %349 = vmatpush.msra.mxu0 0.0
    %350 = vmatpush.msra.mxu0 0.0
    %351 = vmatpush.msra.mxu0 0.0
    %352 = vmatpush.msra.mxu0 0.0
    %353 = vmatpush.msra.mxu0 0.0
    %354 = vmatpush.msra.mxu0 0.0
    %355 = vmatpush.msra.mxu0 0.0
    %356 = vmatpush.msra.mxu0 0.0
    %357 = vmatpush.msra.mxu0 0.0
    %358 = vmatpush.msra.mxu0 0.0
    %359 = vmatpush.msra.mxu0 0.0
    %360 = vmatpush.msra.mxu0 0.0
    %361 = vmatpush.msra.mxu0 %v292
    %362 = vmatpush.msra.mxu0 %v291
    %363 = vmatpush.msra.mxu0 %v290
    %364 = vmatpush.msra.mxu0 %v289
    %365 = vmatmul.f32.gmra.mxu0 %v307
    %v366 = vpop.f32.mrf.mxu0
    %v367 = vadd.f32 0.0, %v366
    %368 = vdwg.mxu0
    %v369 = vadd.f32 %v159, %v367
    %v370 = vxor.u32 %v369, 2147483648
    %v371 = vmul.f32 %v370, 1.442695
    %v372 = vpow.pop %v371
    %v373 = vadd.f32 %v372, 1.0
    %v374 = vrcp.pop %v373
    %v375 = vmul.f32 %v373, %v374
    %v376 = vsub.f32 1.0, %v375
    %v377 = vmul.f32 %v374, %v376
    %v378 = vadd.f32 %v374, %v377
    %vm379 = vweird.f32 %v373
    %vm380 = vweird.f32 %v374
    %vm381 = vmor %vm379, %vm380
    %v382 = vsel %vm381, %v374, %v378
    %v383 = vand.u32 2147483647, %v373
    %vm384 = vcmp.eq.f32.partialorder %v383, 8.507059e+37
    %v385 = vand.u32 %v373, 2147483648
    %v386 = vor.u32 1.1754944e-38, %v385
    %v387 = vsel %vm384, %v386, %v382
    %v388 = vmul.f32 1.0, %v387
    %389 = vmatpush.msra.mxu0 0.0
    %390 = vmatpush.msra.mxu0 0.0
    %391 = vmatpush.msra.mxu0 0.0
    %392 = vmatpush.msra.mxu0 0.0
    %393 = vmatpush.msra.mxu0 0.0
    %394 = vmatpush.msra.mxu0 0.0
    %395 = vmatpush.msra.mxu0 0.0
    %396 = vmatpush.msra.mxu0 0.0
    %397 = vmatpush.msra.mxu0 0.0
    %398 = vmatpush.msra.mxu0 0.0
    %399 = vmatpush.msra.mxu0 0.0
    %400 = vmatpush.msra.mxu0 0.0
    %401 = vmatpush.msra.mxu0 %v297
    %402 = vmatpush.msra.mxu0 %v296
    %403 = vmatpush.msra.mxu0 %v295
    %404 = vmatpush.msra.mxu0 %v294
    %405 = vmatmul.f32.gmra.mxu0 %v307
    %v406 = vpop.f32.mrf.mxu0
    %v407 = vadd.f32 0.0, %v406
    %408 = vdwg.mxu0
    %v409 = vadd.f32 %v210, %v407
    %v410 = vtanh.pop %v409
    %411 = vmatpush.msra.mxu0 0.0
    %412 = vmatpush.msra.mxu0 0.0
    %413 = vmatpush.msra.mxu0 0.0
    %414 = vmatpush.msra.mxu0 0.0
    %415 = vmatpush.msra.mxu0 0.0
    %416 = vmatpush.msra.mxu0 0.0
    %417 = vmatpush.msra.mxu0 0.0
    %418 = vmatpush.msra.mxu0 0.0
    %419 = vmatpush.msra.mxu0 0.0
    %420 = vmatpush.msra.mxu0 0.0
    %421 = vmatpush.msra.mxu0 0.0
    %422 = vmatpush.msra.mxu0 0.0
    %423 = vmatpush.msra.mxu0 %v302
    %424 = vmatpush.msra.mxu0 %v301
    %425 = vmatpush.msra.mxu0 %v300
    %426 = vmatpush.msra.mxu0 %v299
    %427 = vmatmul.f32.gmra.mxu0 %v307
    %v428 = vpop.f32.mrf.mxu0
    %v429 = vadd.f32 0.0, %v428
    %430 = vdwg.mxu0
    %v431 = vadd.f32 %v261, %v429
    %v432 = vxor.u32 %v431, 2147483648
    %v433 = vmul.f32 %v432, 1.442695
    %v434 = vpow.pop %v433
    %v435 = vadd.f32 %v434, 1.0
    %v436 = vrcp.pop %v435
    %v437 = vmul.f32 %v435, %v436
    %v438 = vsub.f32 1.0, %v437
    %v439 = vmul.f32 %v436, %v438
    %v440 = vadd.f32 %v436, %v439
    %vm441 = vweird.f32 %v435
    %vm442 = vweird.f32 %v436
    %vm443 = vmor %vm441, %vm442
    %v444 = vsel %vm443, %v436, %v440
    %v445 = vand.u32 2147483647, %v435
    %vm446 = vcmp.eq.f32.partialorder %v445, 8.507059e+37
    %v447 = vand.u32 %v435, 2147483648
    %v448 = vor.u32 1.1754944e-38, %v447
    %v449 = vsel %vm446, %v448, %v444
    %v450 = vmul.f32 1.0, %v449
    %v451 = vmul.f32 %v388, %v304
    %v452 = vmul.f32 %v348, %v410
    %v453 = vadd.f32 %v451, %v452
    %v454 = vtanh.pop %v453
    %v455 = vmul.f32 %v450, %v454
    %456 = vst.msk [vmem:[#allocation2] sm:$0xff] %vm305, %v455
    %v458 = vsel %vm305, %v455, 0
    %460 = vmatpush.msra.mxu0 0.0
    %461 = vmatpush.msra.mxu0 0.0
    %462 = vmatpush.msra.mxu0 0.0
    %463 = vmatpush.msra.mxu0 0.0
    %464 = vmatpush.msra.mxu0 0.0
    %465 = vmatpush.msra.mxu0 0.0
    %466 = vmatpush.msra.mxu0 0.0
    %467 = vmatpush.msra.mxu0 0.0
    %468 = vmatpush.msra.mxu0 0.0
    %469 = vmatpush.msra.mxu0 0.0
    %470 = vmatpush.msra.mxu0 0.0
    %471 = vmatpush.msra.mxu0 0.0
    %472 = vmatpush.msra.mxu0 %v287
    %473 = vmatpush.msra.mxu0 %v286
    %474 = vmatpush.msra.mxu0 %v285
    %475 = vmatpush.msra.mxu0 %v284
    %476 = vmatmul.f32.gmra.mxu0 %v458
    %v477 = vpop.f32.mrf.mxu0
    %v478 = vadd.f32 0.0, %v477
    %479 = vdwg.mxu0
    %v480 = vadd.f32 %v111, %v478
    %v481 = vxor.u32 %v480, 2147483648
    %v482 = vmul.f32 %v481, 1.442695
    %v483 = vpow.pop %v482
    %v484 = vadd.f32 %v483, 1.0
    %v485 = vrcp.pop %v484
    %v486 = vmul.f32 %v484, %v485
    %v487 = vsub.f32 1.0, %v486
    %v488 = vmul.f32 %v485, %v487
    %v489 = vadd.f32 %v485, %v488
    %vm490 = vweird.f32 %v484
    %vm491 = vweird.f32 %v485
    %vm492 = vmor %vm490, %vm491
    %v493 = vsel %vm492, %v485, %v489
    %v494 = vand.u32 2147483647, %v484
    %vm495 = vcmp.eq.f32.partialorder %v494, 8.507059e+37
    %v496 = vand.u32 %v484, 2147483648
    %v497 = vor.u32 1.1754944e-38, %v496
    %v498 = vsel %vm495, %v497, %v493
    %v499 = vmul.f32 1.0, %v498
    %500 = vmatpush.msra.mxu0 0.0
    %501 = vmatpush.msra.mxu0 0.0
    %502 = vmatpush.msra.mxu0 0.0
    %503 = vmatpush.msra.mxu0 0.0
    %504 = vmatpush.msra.mxu0 0.0
    %505 = vmatpush.msra.mxu0 0.0
    %506 = vmatpush.msra.mxu0 0.0
    %507 = vmatpush.msra.mxu0 0.0
    %508 = vmatpush.msra.mxu0 0.0
    %509 = vmatpush.msra.mxu0 0.0
    %510 = vmatpush.msra.mxu0 0.0
    %511 = vmatpush.msra.mxu0 0.0
    %512 = vmatpush.msra.mxu0 %v292
    %513 = vmatpush.msra.mxu0 %v291
    %514 = vmatpush.msra.mxu0 %v290
    %515 = vmatpush.msra.mxu0 %v289
    %516 = vmatmul.f32.gmra.mxu0 %v458
    %v517 = vpop.f32.mrf.mxu0
    %v518 = vadd.f32 0.0, %v517
    %519 = vdwg.mxu0
    %v520 = vadd.f32 %v162, %v518
    %v521 = vxor.u32 %v520, 2147483648
    %v522 = vmul.f32 %v521, 1.442695
    %v523 = vpow.pop %v522
    %v524 = vadd.f32 %v523, 1.0
    %v525 = vrcp.pop %v524
    %v526 = vmul.f32 %v524, %v525
    %v527 = vsub.f32 1.0, %v526
    %v528 = vmul.f32 %v525, %v527
    %v529 = vadd.f32 %v525, %v528
    %vm530 = vweird.f32 %v524
    %vm531 = vweird.f32 %v525
    %vm532 = vmor %vm530, %vm531
    %v533 = vsel %vm532, %v525, %v529
    %v534 = vand.u32 2147483647, %v524
    %vm535 = vcmp.eq.f32.partialorder %v534, 8.507059e+37
    %v536 = vand.u32 %v524, 2147483648
    %v537 = vor.u32 1.1754944e-38, %v536
    %v538 = vsel %vm535, %v537, %v533
    %v539 = vmul.f32 1.0, %v538
    %540 = vmatpush.msra.mxu0 0.0
    %541 = vmatpush.msra.mxu0 0.0
    %542 = vmatpush.msra.mxu0 0.0
    %543 = vmatpush.msra.mxu0 0.0
    %544 = vmatpush.msra.mxu0 0.0
    %545 = vmatpush.msra.mxu0 0.0
    %546 = vmatpush.msra.mxu0 0.0
    %547 = vmatpush.msra.mxu0 0.0
    %548 = vmatpush.msra.mxu0 0.0
    %549 = vmatpush.msra.mxu0 0.0
    %550 = vmatpush.msra.mxu0 0.0
    %551 = vmatpush.msra.mxu0 0.0
    %552 = vmatpush.msra.mxu0 %v297
    %553 = vmatpush.msra.mxu0 %v296
    %554 = vmatpush.msra.mxu0 %v295
    %555 = vmatpush.msra.mxu0 %v294
    %556 = vmatmul.f32.gmra.mxu0 %v458
    %v557 = vpop.f32.mrf.mxu0
    %v558 = vadd.f32 0.0, %v557
    %559 = vdwg.mxu0
    %v560 = vadd.f32 %v213, %v558
    %v561 = vtanh.pop %v560
    %562 = vmatpush.msra.mxu0 0.0
    %563 = vmatpush.msra.mxu0 0.0
    %564 = vmatpush.msra.mxu0 0.0
    %565 = vmatpush.msra.mxu0 0.0
    %566 = vmatpush.msra.mxu0 0.0
    %567 = vmatpush.msra.mxu0 0.0
    %568 = vmatpush.msra.mxu0 0.0
    %569 = vmatpush.msra.mxu0 0.0
    %570 = vmatpush.msra.mxu0 0.0
    %571 = vmatpush.msra.mxu0 0.0
    %572 = vmatpush.msra.mxu0 0.0
    %573 = vmatpush.msra.mxu0 0.0
    %574 = vmatpush.msra.mxu0 %v302
    %575 = vmatpush.msra.mxu0 %v301
    %576 = vmatpush.msra.mxu0 %v300
    %577 = vmatpush.msra.mxu0 %v299
    %578 = vmatmul.f32.gmra.mxu0 %v458
    %v579 = vpop.f32.mrf.mxu0
    %v580 = vadd.f32 0.0, %v579
    %581 = vdwg.mxu0
    %v582 = vadd.f32 %v264, %v580
    %v583 = vxor.u32 %v582, 2147483648
    %v584 = vmul.f32 %v583, 1.442695
    %v585 = vpow.pop %v584
    %v586 = vadd.f32 %v585, 1.0
    %v587 = vrcp.pop %v586
    %v588 = vmul.f32 %v586, %v587
    %v589 = vsub.f32 1.0, %v588
    %v590 = vmul.f32 %v587, %v589
    %v591 = vadd.f32 %v587, %v590
    %vm592 = vweird.f32 %v586
    %vm593 = vweird.f32 %v587
    %vm594 = vmor %vm592, %vm593
    %v595 = vsel %vm594, %v587, %v591
    %v596 = vand.u32 2147483647, %v586
    %vm597 = vcmp.eq.f32.partialorder %v596, 8.507059e+37
    %v598 = vand.u32 %v586, 2147483648
    %v599 = vor.u32 1.1754944e-38, %v598
    %v600 = vsel %vm597, %v599, %v595
    %v601 = vmul.f32 1.0, %v600
    %v602 = vmul.f32 %v539, %v453
    %v603 = vmul.f32 %v499, %v561
    %v604 = vadd.f32 %v602, %v603
    %v605 = vtanh.pop %v604
    %v606 = vmul.f32 %v601, %v605
    %607 = vst.msk [vmem:[#allocation2 + $0x8] sm:$0xff] %vm305, %v606
    %v609 = vsel %vm305, %v606, 0
    %611 = vmatpush.msra.mxu0 0.0
    %612 = vmatpush.msra.mxu0 0.0
    %613 = vmatpush.msra.mxu0 0.0
    %614 = vmatpush.msra.mxu0 0.0
    %615 = vmatpush.msra.mxu0 0.0
    %616 = vmatpush.msra.mxu0 0.0
    %617 = vmatpush.msra.mxu0 0.0
    %618 = vmatpush.msra.mxu0 0.0
    %619 = vmatpush.msra.mxu0 0.0
    %620 = vmatpush.msra.mxu0 0.0
    %621 = vmatpush.msra.mxu0 0.0
    %622 = vmatpush.msra.mxu0 0.0
    %623 = vmatpush.msra.mxu0 %v287
    %624 = vmatpush.msra.mxu0 %v286
    %625 = vmatpush.msra.mxu0 %v285
    %626 = vmatpush.msra.mxu0 %v284
    %627 = vmatmul.f32.gmra.mxu0 %v609
    %v628 = vpop.f32.mrf.mxu0
    %v629 = vadd.f32 0.0, %v628
    %630 = vdwg.mxu0
    %v631 = vadd.f32 %v114, %v629
    %v632 = vxor.u32 %v631, 2147483648
    %v633 = vmul.f32 %v632, 1.442695
    %v634 = vpow.pop %v633
    %v635 = vadd.f32 %v634, 1.0
    %v636 = vrcp.pop %v635
    %v637 = vmul.f32 %v635, %v636
    %v638 = vsub.f32 1.0, %v637
    %v639 = vmul.f32 %v636, %v638
    %v640 = vadd.f32 %v636, %v639
    %vm641 = vweird.f32 %v635
    %vm642 = vweird.f32 %v636
    %vm643 = vmor %vm641, %vm642
    %v644 = vsel %vm643, %v636, %v640
    %v645 = vand.u32 2147483647, %v635
    %vm646 = vcmp.eq.f32.partialorder %v645, 8.507059e+37
    %v647 = vand.u32 %v635, 2147483648
    %v648 = vor.u32 1.1754944e-38, %v647
    %v649 = vsel %vm646, %v648, %v644
    %v650 = vmul.f32 1.0, %v649
    %651 = vmatpush.msra.mxu0 0.0
    %652 = vmatpush.msra.mxu0 0.0
    %653 = vmatpush.msra.mxu0 0.0
    %654 = vmatpush.msra.mxu0 0.0
    %655 = vmatpush.msra.mxu0 0.0
    %656 = vmatpush.msra.mxu0 0.0
    %657 = vmatpush.msra.mxu0 0.0
    %658 = vmatpush.msra.mxu0 0.0
    %659 = vmatpush.msra.mxu0 0.0
    %660 = vmatpush.msra.mxu0 0.0
    %661 = vmatpush.msra.mxu0 0.0
    %662 = vmatpush.msra.mxu0 0.0
    %663 = vmatpush.msra.mxu0 %v292
    %664 = vmatpush.msra.mxu0 %v291
    %665 = vmatpush.msra.mxu0 %v290
    %666 = vmatpush.msra.mxu0 %v289
    %667 = vmatmul.f32.gmra.mxu0 %v609
    %v668 = vpop.f32.mrf.mxu0
    %v669 = vadd.f32 0.0, %v668
    %670 = vdwg.mxu0
    %v671 = vadd.f32 %v165, %v669
    %v672 = vxor.u32 %v671, 2147483648
    %v673 = vmul.f32 %v672, 1.442695
    %v674 = vpow.pop %v673
    %v675 = vadd.f32 %v674, 1.0
    %v676 = vrcp.pop %v675
    %v677 = vmul.f32 %v675, %v676
    %v678 = vsub.f32 1.0, %v677
    %v679 = vmul.f32 %v676, %v678
    %v680 = vadd.f32 %v676, %v679
    %vm681 = vweird.f32 %v675
    %vm682 = vweird.f32 %v676
    %vm683 = vmor %vm681, %vm682
    %v684 = vsel %vm683, %v676, %v680
    %v685 = vand.u32 2147483647, %v675
    %vm686 = vcmp.eq.f32.partialorder %v685, 8.507059e+37
    %v687 = vand.u32 %v675, 2147483648
    %v688 = vor.u32 1.1754944e-38, %v687
    %v689 = vsel %vm686, %v688, %v684
    %v690 = vmul.f32 1.0, %v689
    %691 = vmatpush.msra.mxu0 0.0
    %692 = vmatpush.msra.mxu0 0.0
    %693 = vmatpush.msra.mxu0 0.0
    %694 = vmatpush.msra.mxu0 0.0
    %695 = vmatpush.msra.mxu0 0.0
    %696 = vmatpush.msra.mxu0 0.0
    %697 = vmatpush.msra.mxu0 0.0
    %698 = vmatpush.msra.mxu0 0.0
    %699 = vmatpush.msra.mxu0 0.0
    %700 = vmatpush.msra.mxu0 0.0
    %701 = vmatpush.msra.mxu0 0.0
    %702 = vmatpush.msra.mxu0 0.0
    %703 = vmatpush.msra.mxu0 %v297
    %704 = vmatpush.msra.mxu0 %v296
    %705 = vmatpush.msra.mxu0 %v295
    %706 = vmatpush.msra.mxu0 %v294
    %707 = vmatmul.f32.gmra.mxu0 %v609
    %v708 = vpop.f32.mrf.mxu0
    %v709 = vadd.f32 0.0, %v708
    %710 = vdwg.mxu0
    %v711 = vadd.f32 %v216, %v709
    %v712 = vtanh.pop %v711
    %713 = vmatpush.msra.mxu0 0.0
    %714 = vmatpush.msra.mxu0 0.0
    %715 = vmatpush.msra.mxu0 0.0
    %716 = vmatpush.msra.mxu0 0.0
    %717 = vmatpush.msra.mxu0 0.0
    %718 = vmatpush.msra.mxu0 0.0
    %719 = vmatpush.msra.mxu0 0.0
    %720 = vmatpush.msra.mxu0 0.0
    %721 = vmatpush.msra.mxu0 0.0
    %722 = vmatpush.msra.mxu0 0.0
    %723 = vmatpush.msra.mxu0 0.0
    %724 = vmatpush.msra.mxu0 0.0
    %725 = vmatpush.msra.mxu0 %v302
    %726 = vmatpush.msra.mxu0 %v301
    %727 = vmatpush.msra.mxu0 %v300
    %728 = vmatpush.msra.mxu0 %v299
    %729 = vmatmul.f32.gmra.mxu0 %v609
    %v730 = vpop.f32.mrf.mxu0
    %v731 = vadd.f32 0.0, %v730
    %732 = vdwg.mxu0
    %v733 = vadd.f32 %v267, %v731
    %v734 = vxor.u32 %v733, 2147483648
    %v735 = vmul.f32 %v734, 1.442695
    %v736 = vpow.pop %v735
    %v737 = vadd.f32 %v736, 1.0
    %v738 = vrcp.pop %v737
    %v739 = vmul.f32 %v737, %v738
    %v740 = vsub.f32 1.0, %v739
    %v741 = vmul.f32 %v738, %v740
    %v742 = vadd.f32 %v738, %v741
    %vm743 = vweird.f32 %v737
    %vm744 = vweird.f32 %v738
    %vm745 = vmor %vm743, %vm744
    %v746 = vsel %vm745, %v738, %v742
    %v747 = vand.u32 2147483647, %v737
    %vm748 = vcmp.eq.f32.partialorder %v747, 8.507059e+37
    %v749 = vand.u32 %v737, 2147483648
    %v750 = vor.u32 1.1754944e-38, %v749
    %v751 = vsel %vm748, %v750, %v746
    %v752 = vmul.f32 1.0, %v751
    %v753 = vmul.f32 %v690, %v604
    %v754 = vmul.f32 %v650, %v712
    %v755 = vadd.f32 %v753, %v754
    %v756 = vtanh.pop %v755
    %v757 = vmul.f32 %v752, %v756
    %758 = vst.msk [vmem:[#allocation2 + $0x10] sm:$0xff] %vm305, %v757
    %v760 = vsel %vm305, %v757, 0
    %762 = vmatpush.msra.mxu0 0.0
    %763 = vmatpush.msra.mxu0 0.0
    %764 = vmatpush.msra.mxu0 0.0
    %765 = vmatpush.msra.mxu0 0.0
    %766 = vmatpush.msra.mxu0 0.0
    %767 = vmatpush.msra.mxu0 0.0
    %768 = vmatpush.msra.mxu0 0.0
    %769 = vmatpush.msra.mxu0 0.0
    %770 = vmatpush.msra.mxu0 0.0
    %771 = vmatpush.msra.mxu0 0.0
    %772 = vmatpush.msra.mxu0 0.0
    %773 = vmatpush.msra.mxu0 0.0
    %774 = vmatpush.msra.mxu0 %v287
    %775 = vmatpush.msra.mxu0 %v286
    %776 = vmatpush.msra.mxu0 %v285
    %777 = vmatpush.msra.mxu0 %v284
    %778 = vmatmul.f32.gmra.mxu0 %v760
    %v779 = vpop.f32.mrf.mxu0
    %v780 = vadd.f32 0.0, %v779
    %781 = vdwg.mxu0
    %v782 = vadd.f32 %v117, %v780
    %v783 = vxor.u32 %v782, 2147483648
    %v784 = vmul.f32 %v783, 1.442695
    %v785 = vpow.pop %v784
    %v786 = vadd.f32 %v785, 1.0
    %v787 = vrcp.pop %v786
    %v788 = vmul.f32 %v786, %v787
    %v789 = vsub.f32 1.0, %v788
    %v790 = vmul.f32 %v787, %v789
    %v791 = vadd.f32 %v787, %v790
    %vm792 = vweird.f32 %v786
    %vm793 = vweird.f32 %v787
    %vm794 = vmor %vm792, %vm793
    %v795 = vsel %vm794, %v787, %v791
    %v796 = vand.u32 2147483647, %v786
    %vm797 = vcmp.eq.f32.partialorder %v796, 8.507059e+37
    %v798 = vand.u32 %v786, 2147483648
    %v799 = vor.u32 1.1754944e-38, %v798
    %v800 = vsel %vm797, %v799, %v795
    %v801 = vmul.f32 1.0, %v800
    %802 = vmatpush.msra.mxu0 0.0
    %803 = vmatpush.msra.mxu0 0.0
    %804 = vmatpush.msra.mxu0 0.0
    %805 = vmatpush.msra.mxu0 0.0
    %806 = vmatpush.msra.mxu0 0.0
    %807 = vmatpush.msra.mxu0 0.0
    %808 = vmatpush.msra.mxu0 0.0
    %809 = vmatpush.msra.mxu0 0.0
    %810 = vmatpush.msra.mxu0 0.0
    %811 = vmatpush.msra.mxu0 0.0
    %812 = vmatpush.msra.mxu0 0.0
    %813 = vmatpush.msra.mxu0 0.0
    %814 = vmatpush.msra.mxu0 %v292
    %815 = vmatpush.msra.mxu0 %v291
    %816 = vmatpush.msra.mxu0 %v290
    %817 = vmatpush.msra.mxu0 %v289
    %818 = vmatmul.f32.gmra.mxu0 %v760
    %v819 = vpop.f32.mrf.mxu0
    %v820 = vadd.f32 0.0, %v819
    %821 = vdwg.mxu0
    %v822 = vadd.f32 %v168, %v820
    %v823 = vxor.u32 %v822, 2147483648
    %v824 = vmul.f32 %v823, 1.442695
    %v825 = vpow.pop %v824
    %v826 = vadd.f32 %v825, 1.0
    %v827 = vrcp.pop %v826
    %v828 = vmul.f32 %v826, %v827
    %v829 = vsub.f32 1.0, %v828
    %v830 = vmul.f32 %v827, %v829
    %v831 = vadd.f32 %v827, %v830
    %vm832 = vweird.f32 %v826
    %vm833 = vweird.f32 %v827
    %vm834 = vmor %vm832, %vm833
    %v835 = vsel %vm834, %v827, %v831
    %v836 = vand.u32 2147483647, %v826
    %vm837 = vcmp.eq.f32.partialorder %v836, 8.507059e+37
    %v838 = vand.u32 %v826, 2147483648
    %v839 = vor.u32 1.1754944e-38, %v838
    %v840 = vsel %vm837, %v839, %v835
    %v841 = vmul.f32 1.0, %v840
    %842 = vmatpush.msra.mxu0 0.0
    %843 = vmatpush.msra.mxu0 0.0
    %844 = vmatpush.msra.mxu0 0.0
    %845 = vmatpush.msra.mxu0 0.0
    %846 = vmatpush.msra.mxu0 0.0
    %847 = vmatpush.msra.mxu0 0.0
    %848 = vmatpush.msra.mxu0 0.0
    %849 = vmatpush.msra.mxu0 0.0
    %850 = vmatpush.msra.mxu0 0.0
    %851 = vmatpush.msra.mxu0 0.0
    %852 = vmatpush.msra.mxu0 0.0
    %853 = vmatpush.msra.mxu0 0.0
    %854 = vmatpush.msra.mxu0 %v297
    %855 = vmatpush.msra.mxu0 %v296
    %856 = vmatpush.msra.mxu0 %v295
    %857 = vmatpush.msra.mxu0 %v294
    %858 = vmatmul.f32.gmra.mxu0 %v760
    %v859 = vpop.f32.mrf.mxu0
    %v860 = vadd.f32 0.0, %v859
    %861 = vdwg.mxu0
    %v862 = vadd.f32 %v219, %v860
    %v863 = vtanh.pop %v862
    %864 = vmatpush.msra.mxu0 0.0
    %865 = vmatpush.msra.mxu0 0.0
    %866 = vmatpush.msra.mxu0 0.0
    %867 = vmatpush.msra.mxu0 0.0
    %868 = vmatpush.msra.mxu0 0.0
    %869 = vmatpush.msra.mxu0 0.0
    %870 = vmatpush.msra.mxu0 0.0
    %871 = vmatpush.msra.mxu0 0.0
    %872 = vmatpush.msra.mxu0 0.0
    %873 = vmatpush.msra.mxu0 0.0
    %874 = vmatpush.msra.mxu0 0.0
    %875 = vmatpush.msra.mxu0 0.0
    %876 = vmatpush.msra.mxu0 %v302
    %877 = vmatpush.msra.mxu0 %v301
    %878 = vmatpush.msra.mxu0 %v300
    %879 = vmatpush.msra.mxu0 %v299
    %880 = vmatmul.f32.gmra.mxu0 %v760
    %v881 = vpop.f32.mrf.mxu0
    %v882 = vadd.f32 0.0, %v881
    %883 = vdwg.mxu0
    %v884 = vadd.f32 %v270, %v882
    %v885 = vxor.u32 %v884, 2147483648
    %v886 = vmul.f32 %v885, 1.442695
    %v887 = vpow.pop %v886
    %v888 = vadd.f32 %v887, 1.0
    %v889 = vrcp.pop %v888
    %v890 = vmul.f32 %v888, %v889
    %v891 = vsub.f32 1.0, %v890
    %v892 = vmul.f32 %v889, %v891
    %v893 = vadd.f32 %v889, %v892
    %vm894 = vweird.f32 %v888
    %vm895 = vweird.f32 %v889
    %vm896 = vmor %vm894, %vm895
    %v897 = vsel %vm896, %v889, %v893
    %v898 = vand.u32 2147483647, %v888
    %vm899 = vcmp.eq.f32.partialorder %v898, 8.507059e+37
    %v900 = vand.u32 %v888, 2147483648
    %v901 = vor.u32 1.1754944e-38, %v900
    %v902 = vsel %vm899, %v901, %v897
    %v903 = vmul.f32 1.0, %v902
    %v904 = vmul.f32 %v841, %v755
    %v905 = vmul.f32 %v801, %v863
    %v906 = vadd.f32 %v904, %v905
    %v907 = vtanh.pop %v906
    %v908 = vmul.f32 %v903, %v907
    %909 = vst.msk [vmem:[#allocation2 + $0x18] sm:$0xff] %vm305, %v908
    %v911 = vsel %vm305, %v908, 0
    %913 = vmatpush.msra.mxu0 0.0
    %914 = vmatpush.msra.mxu0 0.0
    %915 = vmatpush.msra.mxu0 0.0
    %916 = vmatpush.msra.mxu0 0.0
    %917 = vmatpush.msra.mxu0 0.0
    %918 = vmatpush.msra.mxu0 0.0
    %919 = vmatpush.msra.mxu0 0.0
    %920 = vmatpush.msra.mxu0 0.0
    %921 = vmatpush.msra.mxu0 0.0
    %922 = vmatpush.msra.mxu0 0.0
    %923 = vmatpush.msra.mxu0 0.0
    %924 = vmatpush.msra.mxu0 0.0
    %925 = vmatpush.msra.mxu0 %v287
    %926 = vmatpush.msra.mxu0 %v286
    %927 = vmatpush.msra.mxu0 %v285
    %928 = vmatpush.msra.mxu0 %v284
    %929 = vmatmul.f32.gmra.mxu0 %v911
    %v930 = vpop.f32.mrf.mxu0
    %v931 = vadd.f32 0.0, %v930
    %932 = vdwg.mxu0
    %v933 = vadd.f32 %v120, %v931
    %v934 = vxor.u32 %v933, 2147483648
    %v935 = vmul.f32 %v934, 1.442695
    %v936 = vpow.pop %v935
    %v937 = vadd.f32 %v936, 1.0
    %v938 = vrcp.pop %v937
    %v939 = vmul.f32 %v937, %v938
    %v940 = vsub.f32 1.0, %v939
    %v941 = vmul.f32 %v938, %v940
    %v942 = vadd.f32 %v938, %v941
    %vm943 = vweird.f32 %v937
    %vm944 = vweird.f32 %v938
    %vm945 = vmor %vm943, %vm944
    %v946 = vsel %vm945, %v938, %v942
    %v947 = vand.u32 2147483647, %v937
    %vm948 = vcmp.eq.f32.partialorder %v947, 8.507059e+37
    %v949 = vand.u32 %v937, 2147483648
    %v950 = vor.u32 1.1754944e-38, %v949
    %v951 = vsel %vm948, %v950, %v946
    %v952 = vmul.f32 1.0, %v951
    %953 = vmatpush.msra.mxu0 0.0
    %954 = vmatpush.msra.mxu0 0.0
    %955 = vmatpush.msra.mxu0 0.0
    %956 = vmatpush.msra.mxu0 0.0
    %957 = vmatpush.msra.mxu0 0.0
    %958 = vmatpush.msra.mxu0 0.0
    %959 = vmatpush.msra.mxu0 0.0
    %960 = vmatpush.msra.mxu0 0.0
    %961 = vmatpush.msra.mxu0 0.0
    %962 = vmatpush.msra.mxu0 0.0
    %963 = vmatpush.msra.mxu0 0.0
    %964 = vmatpush.msra.mxu0 0.0
    %965 = vmatpush.msra.mxu0 %v292
    %966 = vmatpush.msra.mxu0 %v291
    %967 = vmatpush.msra.mxu0 %v290
    %968 = vmatpush.msra.mxu0 %v289
    %969 = vmatmul.f32.gmra.mxu0 %v911
    %v970 = vpop.f32.mrf.mxu0
    %v971 = vadd.f32 0.0, %v970
    %972 = vdwg.mxu0
    %v973 = vadd.f32 %v171, %v971
    %v974 = vxor.u32 %v973, 2147483648
    %v975 = vmul.f32 %v974, 1.442695
    %v976 = vpow.pop %v975
    %v977 = vadd.f32 %v976, 1.0
    %v978 = vrcp.pop %v977
    %v979 = vmul.f32 %v977, %v978
    %v980 = vsub.f32 1.0, %v979
    %v981 = vmul.f32 %v978, %v980
    %v982 = vadd.f32 %v978, %v981
    %vm983 = vweird.f32 %v977
    %vm984 = vweird.f32 %v978
    %vm985 = vmor %vm983, %vm984
    %v986 = vsel %vm985, %v978, %v982
    %v987 = vand.u32 2147483647, %v977
    %vm988 = vcmp.eq.f32.partialorder %v987, 8.507059e+37
    %v989 = vand.u32 %v977, 2147483648
    %v990 = vor.u32 1.1754944e-38, %v989
    %v991 = vsel %vm988, %v990, %v986
    %v992 = vmul.f32 1.0, %v991
    %993 = vmatpush.msra.mxu0 0.0
    %994 = vmatpush.msra.mxu0 0.0
    %995 = vmatpush.msra.mxu0 0.0
    %996 = vmatpush.msra.mxu0 0.0
    %997 = vmatpush.msra.mxu0 0.0
    %998 = vmatpush.msra.mxu0 0.0
    %999 = vmatpush.msra.mxu0 0.0
    %1000 = vmatpush.msra.mxu0 0.0
    %1001 = vmatpush.msra.mxu0 0.0
    %1002 = vmatpush.msra.mxu0 0.0
    %1003 = vmatpush.msra.mxu0 0.0
    %1004 = vmatpush.msra.mxu0 0.0
    %1005 = vmatpush.msra.mxu0 %v297
    %1006 = vmatpush.msra.mxu0 %v296
    %1007 = vmatpush.msra.mxu0 %v295
    %1008 = vmatpush.msra.mxu0 %v294
    %1009 = vmatmul.f32.gmra.mxu0 %v911
    %v1010 = vpop.f32.mrf.mxu0
    %v1011 = vadd.f32 0.0, %v1010
    %1012 = vdwg.mxu0
    %v1013 = vadd.f32 %v222, %v1011
    %v1014 = vtanh.pop %v1013
    %1015 = vmatpush.msra.mxu0 0.0
    %1016 = vmatpush.msra.mxu0 0.0
    %1017 = vmatpush.msra.mxu0 0.0
    %1018 = vmatpush.msra.mxu0 0.0
    %1019 = vmatpush.msra.mxu0 0.0
    %1020 = vmatpush.msra.mxu0 0.0
    %1021 = vmatpush.msra.mxu0 0.0
    %1022 = vmatpush.msra.mxu0 0.0
    %1023 = vmatpush.msra.mxu0 0.0
    %1024 = vmatpush.msra.mxu0 0.0
    %1025 = vmatpush.msra.mxu0 0.0
    %1026 = vmatpush.msra.mxu0 0.0
    %1027 = vmatpush.msra.mxu0 %v302
    %1028 = vmatpush.msra.mxu0 %v301
    %1029 = vmatpush.msra.mxu0 %v300
    %1030 = vmatpush.msra.mxu0 %v299
    %1031 = vmatmul.f32.gmra.mxu0 %v911
    %v1032 = vpop.f32.mrf.mxu0
    %v1033 = vadd.f32 0.0, %v1032
    %1034 = vdwg.mxu0
    %v1035 = vadd.f32 %v273, %v1033
    %v1036 = vxor.u32 %v1035, 2147483648
    %v1037 = vmul.f32 %v1036, 1.442695
    %v1038 = vpow.pop %v1037
    %v1039 = vadd.f32 %v1038, 1.0
    %v1040 = vrcp.pop %v1039
    %v1041 = vmul.f32 %v1039, %v1040
    %v1042 = vsub.f32 1.0, %v1041
    %v1043 = vmul.f32 %v1040, %v1042
    %v1044 = vadd.f32 %v1040, %v1043
    %vm1045 = vweird.f32 %v1039
    %vm1046 = vweird.f32 %v1040
    %vm1047 = vmor %vm1045, %vm1046
    %v1048 = vsel %vm1047, %v1040, %v1044
    %v1049 = vand.u32 2147483647, %v1039
    %vm1050 = vcmp.eq.f32.partialorder %v1049, 8.507059e+37
    %v1051 = vand.u32 %v1039, 2147483648
    %v1052 = vor.u32 1.1754944e-38, %v1051
    %v1053 = vsel %vm1050, %v1052, %v1048
    %v1054 = vmul.f32 1.0, %v1053
    %v1055 = vmul.f32 %v992, %v906
    %v1056 = vmul.f32 %v952, %v1014
    %v1057 = vadd.f32 %v1055, %v1056
    %v1058 = vtanh.pop %v1057
    %v1059 = vmul.f32 %v1054, %v1058
    %1060 = vst.msk [vmem:[#allocation2 + $0x20] sm:$0xff] %vm305, %v1059
    %v1062 = vsel %vm305, %v1059, 0
    %1064 = vmatpush.msra.mxu0 0.0
    %1065 = vmatpush.msra.mxu0 0.0
    %1066 = vmatpush.msra.mxu0 0.0
    %1067 = vmatpush.msra.mxu0 0.0
    %1068 = vmatpush.msra.mxu0 0.0
    %1069 = vmatpush.msra.mxu0 0.0
    %1070 = vmatpush.msra.mxu0 0.0
    %1071 = vmatpush.msra.mxu0 0.0
    %1072 = vmatpush.msra.mxu0 0.0
    %1073 = vmatpush.msra.mxu0 0.0
    %1074 = vmatpush.msra.mxu0 0.0
    %1075 = vmatpush.msra.mxu0 0.0
    %1076 = vmatpush.msra.mxu0 %v287
    %1077 = vmatpush.msra.mxu0 %v286
    %1078 = vmatpush.msra.mxu0 %v285
    %1079 = vmatpush.msra.mxu0 %v284
    %1080 = vmatmul.f32.gmra.mxu0 %v1062
    %v1081 = vpop.f32.mrf.mxu0
    %v1082 = vadd.f32 0.0, %v1081
    %1083 = vdwg.mxu0
    %v1084 = vadd.f32 %v123, %v1082
    %v1085 = vxor.u32 %v1084, 2147483648
    %v1086 = vmul.f32 %v1085, 1.442695
    %v1087 = vpow.pop %v1086
    %v1088 = vadd.f32 %v1087, 1.0
    %v1089 = vrcp.pop %v1088
    %v1090 = vmul.f32 %v1088, %v1089
    %v1091 = vsub.f32 1.0, %v1090
    %v1092 = vmul.f32 %v1089, %v1091
    %v1093 = vadd.f32 %v1089, %v1092
    %vm1094 = vweird.f32 %v1088
    %vm1095 = vweird.f32 %v1089
    %vm1096 = vmor %vm1094, %vm1095
    %v1097 = vsel %vm1096, %v1089, %v1093
    %v1098 = vand.u32 2147483647, %v1088
    %vm1099 = vcmp.eq.f32.partialorder %v1098, 8.507059e+37
    %v1100 = vand.u32 %v1088, 2147483648
    %v1101 = vor.u32 1.1754944e-38, %v1100
    %v1102 = vsel %vm1099, %v1101, %v1097
    %v1103 = vmul.f32 1.0, %v1102
    %1104 = vmatpush.msra.mxu0 0.0
    %1105 = vmatpush.msra.mxu0 0.0
    %1106 = vmatpush.msra.mxu0 0.0
    %1107 = vmatpush.msra.mxu0 0.0
    %1108 = vmatpush.msra.mxu0 0.0
    %1109 = vmatpush.msra.mxu0 0.0
    %1110 = vmatpush.msra.mxu0 0.0
    %1111 = vmatpush.msra.mxu0 0.0
    %1112 = vmatpush.msra.mxu0 0.0
    %1113 = vmatpush.msra.mxu0 0.0
    %1114 = vmatpush.msra.mxu0 0.0
    %1115 = vmatpush.msra.mxu0 0.0
    %1116 = vmatpush.msra.mxu0 %v292
    %1117 = vmatpush.msra.mxu0 %v291
    %1118 = vmatpush.msra.mxu0 %v290
    %1119 = vmatpush.msra.mxu0 %v289
    %1120 = vmatmul.f32.gmra.mxu0 %v1062
    %v1121 = vpop.f32.mrf.mxu0
    %v1122 = vadd.f32 0.0, %v1121
    %1123 = vdwg.mxu0
    %v1124 = vadd.f32 %v174, %v1122
    %v1125 = vxor.u32 %v1124, 2147483648
    %v1126 = vmul.f32 %v1125, 1.442695
    %v1127 = vpow.pop %v1126
    %v1128 = vadd.f32 %v1127, 1.0
    %v1129 = vrcp.pop %v1128
    %v1130 = vmul.f32 %v1128, %v1129
    %v1131 = vsub.f32 1.0, %v1130
    %v1132 = vmul.f32 %v1129, %v1131
    %v1133 = vadd.f32 %v1129, %v1132
    %vm1134 = vweird.f32 %v1128
    %vm1135 = vweird.f32 %v1129
    %vm1136 = vmor %vm1134, %vm1135
    %v1137 = vsel %vm1136, %v1129, %v1133
    %v1138 = vand.u32 2147483647, %v1128
    %vm1139 = vcmp.eq.f32.partialorder %v1138, 8.507059e+37
    %v1140 = vand.u32 %v1128, 2147483648
    %v1141 = vor.u32 1.1754944e-38, %v1140
    %v1142 = vsel %vm1139, %v1141, %v1137
    %v1143 = vmul.f32 1.0, %v1142
    %1144 = vmatpush.msra.mxu0 0.0
    %1145 = vmatpush.msra.mxu0 0.0
    %1146 = vmatpush.msra.mxu0 0.0
    %1147 = vmatpush.msra.mxu0 0.0
    %1148 = vmatpush.msra.mxu0 0.0
    %1149 = vmatpush.msra.mxu0 0.0
    %1150 = vmatpush.msra.mxu0 0.0
    %1151 = vmatpush.msra.mxu0 0.0
    %1152 = vmatpush.msra.mxu0 0.0
    %1153 = vmatpush.msra.mxu0 0.0
    %1154 = vmatpush.msra.mxu0 0.0
    %1155 = vmatpush.msra.mxu0 0.0
    %1156 = vmatpush.msra.mxu0 %v297
    %1157 = vmatpush.msra.mxu0 %v296
    %1158 = vmatpush.msra.mxu0 %v295
    %1159 = vmatpush.msra.mxu0 %v294
    %1160 = vmatmul.f32.gmra.mxu0 %v1062
    %v1161 = vpop.f32.mrf.mxu0
    %v1162 = vadd.f32 0.0, %v1161
    %1163 = vdwg.mxu0
    %v1164 = vadd.f32 %v225, %v1162
    %v1165 = vtanh.pop %v1164
    %1166 = vmatpush.msra.mxu0 0.0
    %1167 = vmatpush.msra.mxu0 0.0
    %1168 = vmatpush.msra.mxu0 0.0
    %1169 = vmatpush.msra.mxu0 0.0
    %1170 = vmatpush.msra.mxu0 0.0
    %1171 = vmatpush.msra.mxu0 0.0
    %1172 = vmatpush.msra.mxu0 0.0
    %1173 = vmatpush.msra.mxu0 0.0
    %1174 = vmatpush.msra.mxu0 0.0
    %1175 = vmatpush.msra.mxu0 0.0
    %1176 = vmatpush.msra.mxu0 0.0
    %1177 = vmatpush.msra.mxu0 0.0
    %1178 = vmatpush.msra.mxu0 %v302
    %1179 = vmatpush.msra.mxu0 %v301
    %1180 = vmatpush.msra.mxu0 %v300
    %1181 = vmatpush.msra.mxu0 %v299
    %1182 = vmatmul.f32.gmra.mxu0 %v1062
    %v1183 = vpop.f32.mrf.mxu0
    %v1184 = vadd.f32 0.0, %v1183
    %1185 = vdwg.mxu0
    %v1186 = vadd.f32 %v276, %v1184
    %v1187 = vxor.u32 %v1186, 2147483648
    %v1188 = vmul.f32 %v1187, 1.442695
    %v1189 = vpow.pop %v1188
    %v1190 = vadd.f32 %v1189, 1.0
    %v1191 = vrcp.pop %v1190
    %v1192 = vmul.f32 %v1190, %v1191
    %v1193 = vsub.f32 1.0, %v1192
    %v1194 = vmul.f32 %v1191, %v1193
    %v1195 = vadd.f32 %v1191, %v1194
    %vm1196 = vweird.f32 %v1190
    %vm1197 = vweird.f32 %v1191
    %vm1198 = vmor %vm1196, %vm1197
    %v1199 = vsel %vm1198, %v1191, %v1195
    %v1200 = vand.u32 2147483647, %v1190
    %vm1201 = vcmp.eq.f32.partialorder %v1200, 8.507059e+37
    %v1202 = vand.u32 %v1190, 2147483648
    %v1203 = vor.u32 1.1754944e-38, %v1202
    %v1204 = vsel %vm1201, %v1203, %v1199
    %v1205 = vmul.f32 1.0, %v1204
    %v1206 = vmul.f32 %v1143, %v1057
    %v1207 = vmul.f32 %v1103, %v1165
    %v1208 = vadd.f32 %v1206, %v1207
    %v1209 = vtanh.pop %v1208
    %v1210 = vmul.f32 %v1205, %v1209
    %1211 = vst.msk [vmem:[#allocation2 + $0x28] sm:$0xff] %vm305, %v1210
    %v1213 = vsel %vm305, %v1210, 0
    %1215 = vmatpush.msra.mxu0 0.0
    %1216 = vmatpush.msra.mxu0 0.0
    %1217 = vmatpush.msra.mxu0 0.0
    %1218 = vmatpush.msra.mxu0 0.0
    %1219 = vmatpush.msra.mxu0 0.0
    %1220 = vmatpush.msra.mxu0 0.0
    %1221 = vmatpush.msra.mxu0 0.0
    %1222 = vmatpush.msra.mxu0 0.0
    %1223 = vmatpush.msra.mxu0 0.0
    %1224 = vmatpush.msra.mxu0 0.0
    %1225 = vmatpush.msra.mxu0 0.0
    %1226 = vmatpush.msra.mxu0 0.0
    %1227 = vmatpush.msra.mxu0 %v287
    %1228 = vmatpush.msra.mxu0 %v286
    %1229 = vmatpush.msra.mxu0 %v285
    %1230 = vmatpush.msra.mxu0 %v284
    %1231 = vmatmul.f32.gmra.mxu0 %v1213
    %v1232 = vpop.f32.mrf.mxu0
    %v1233 = vadd.f32 0.0, %v1232
    %1234 = vdwg.mxu0
    %v1235 = vadd.f32 %v126, %v1233
    %v1236 = vxor.u32 %v1235, 2147483648
    %v1237 = vmul.f32 %v1236, 1.442695
    %v1238 = vpow.pop %v1237
    %v1239 = vadd.f32 %v1238, 1.0
    %v1240 = vrcp.pop %v1239
    %v1241 = vmul.f32 %v1239, %v1240
    %v1242 = vsub.f32 1.0, %v1241
    %v1243 = vmul.f32 %v1240, %v1242
    %v1244 = vadd.f32 %v1240, %v1243
    %vm1245 = vweird.f32 %v1239
    %vm1246 = vweird.f32 %v1240
    %vm1247 = vmor %vm1245, %vm1246
    %v1248 = vsel %vm1247, %v1240, %v1244
    %v1249 = vand.u32 2147483647, %v1239
    %vm1250 = vcmp.eq.f32.partialorder %v1249, 8.507059e+37
    %v1251 = vand.u32 %v1239, 2147483648
    %v1252 = vor.u32 1.1754944e-38, %v1251
    %v1253 = vsel %vm1250, %v1252, %v1248
    %v1254 = vmul.f32 1.0, %v1253
    %1255 = vmatpush.msra.mxu0 0.0
    %1256 = vmatpush.msra.mxu0 0.0
    %1257 = vmatpush.msra.mxu0 0.0
    %1258 = vmatpush.msra.mxu0 0.0
    %1259 = vmatpush.msra.mxu0 0.0
    %1260 = vmatpush.msra.mxu0 0.0
    %1261 = vmatpush.msra.mxu0 0.0
    %1262 = vmatpush.msra.mxu0 0.0
    %1263 = vmatpush.msra.mxu0 0.0
    %1264 = vmatpush.msra.mxu0 0.0
    %1265 = vmatpush.msra.mxu0 0.0
    %1266 = vmatpush.msra.mxu0 0.0
    %1267 = vmatpush.msra.mxu0 %v292
    %1268 = vmatpush.msra.mxu0 %v291
    %1269 = vmatpush.msra.mxu0 %v290
    %1270 = vmatpush.msra.mxu0 %v289
    %1271 = vmatmul.f32.gmra.mxu0 %v1213
    %v1272 = vpop.f32.mrf.mxu0
    %v1273 = vadd.f32 0.0, %v1272
    %1274 = vdwg.mxu0
    %v1275 = vadd.f32 %v177, %v1273
    %v1276 = vxor.u32 %v1275, 2147483648
    %v1277 = vmul.f32 %v1276, 1.442695
    %v1278 = vpow.pop %v1277
    %v1279 = vadd.f32 %v1278, 1.0
    %v1280 = vrcp.pop %v1279
    %v1281 = vmul.f32 %v1279, %v1280
    %v1282 = vsub.f32 1.0, %v1281
    %v1283 = vmul.f32 %v1280, %v1282
    %v1284 = vadd.f32 %v1280, %v1283
    %vm1285 = vweird.f32 %v1279
    %vm1286 = vweird.f32 %v1280
    %vm1287 = vmor %vm1285, %vm1286
    %v1288 = vsel %vm1287, %v1280, %v1284
    %v1289 = vand.u32 2147483647, %v1279
    %vm1290 = vcmp.eq.f32.partialorder %v1289, 8.507059e+37
    %v1291 = vand.u32 %v1279, 2147483648
    %v1292 = vor.u32 1.1754944e-38, %v1291
    %v1293 = vsel %vm1290, %v1292, %v1288
    %v1294 = vmul.f32 1.0, %v1293
    %1295 = vmatpush.msra.mxu0 0.0
    %1296 = vmatpush.msra.mxu0 0.0
    %1297 = vmatpush.msra.mxu0 0.0
    %1298 = vmatpush.msra.mxu0 0.0
    %1299 = vmatpush.msra.mxu0 0.0
    %1300 = vmatpush.msra.mxu0 0.0
    %1301 = vmatpush.msra.mxu0 0.0
    %1302 = vmatpush.msra.mxu0 0.0
    %1303 = vmatpush.msra.mxu0 0.0
    %1304 = vmatpush.msra.mxu0 0.0
    %1305 = vmatpush.msra.mxu0 0.0
    %1306 = vmatpush.msra.mxu0 0.0
    %1307 = vmatpush.msra.mxu0 %v297
    %1308 = vmatpush.msra.mxu0 %v296
    %1309 = vmatpush.msra.mxu0 %v295
    %1310 = vmatpush.msra.mxu0 %v294
    %1311 = vmatmul.f32.gmra.mxu0 %v1213
    %v1312 = vpop.f32.mrf.mxu0
    %v1313 = vadd.f32 0.0, %v1312
    %1314 = vdwg.mxu0
    %v1315 = vadd.f32 %v228, %v1313
    %v1316 = vtanh.pop %v1315
    %1317 = vmatpush.msra.mxu0 0.0
    %1318 = vmatpush.msra.mxu0 0.0
    %1319 = vmatpush.msra.mxu0 0.0
    %1320 = vmatpush.msra.mxu0 0.0
    %1321 = vmatpush.msra.mxu0 0.0
    %1322 = vmatpush.msra.mxu0 0.0
    %1323 = vmatpush.msra.mxu0 0.0
    %1324 = vmatpush.msra.mxu0 0.0
    %1325 = vmatpush.msra.mxu0 0.0
    %1326 = vmatpush.msra.mxu0 0.0
    %1327 = vmatpush.msra.mxu0 0.0
    %1328 = vmatpush.msra.mxu0 0.0
    %1329 = vmatpush.msra.mxu0 %v302
    %1330 = vmatpush.msra.mxu0 %v301
    %1331 = vmatpush.msra.mxu0 %v300
    %1332 = vmatpush.msra.mxu0 %v299
    %1333 = vmatmul.f32.gmra.mxu0 %v1213
    %v1334 = vpop.f32.mrf.mxu0
    %v1335 = vadd.f32 0.0, %v1334
    %1336 = vdwg.mxu0
    %v1337 = vadd.f32 %v279, %v1335
    %v1338 = vxor.u32 %v1337, 2147483648
    %v1339 = vmul.f32 %v1338, 1.442695
    %v1340 = vpow.pop %v1339
    %v1341 = vadd.f32 %v1340, 1.0
    %v1342 = vrcp.pop %v1341
    %v1343 = vmul.f32 %v1341, %v1342
    %v1344 = vsub.f32 1.0, %v1343
    %v1345 = vmul.f32 %v1342, %v1344
    %v1346 = vadd.f32 %v1342, %v1345
    %vm1347 = vweird.f32 %v1341
    %vm1348 = vweird.f32 %v1342
    %vm1349 = vmor %vm1347, %vm1348
    %v1350 = vsel %vm1349, %v1342, %v1346
    %v1351 = vand.u32 2147483647, %v1341
    %vm1352 = vcmp.eq.f32.partialorder %v1351, 8.507059e+37
    %v1353 = vand.u32 %v1341, 2147483648
    %v1354 = vor.u32 1.1754944e-38, %v1353
    %v1355 = vsel %vm1352, %v1354, %v1350
    %v1356 = vmul.f32 1.0, %v1355
    %v1357 = vmul.f32 %v1294, %v1208
    %v1358 = vmul.f32 %v1254, %v1316
    %v1359 = vadd.f32 %v1357, %v1358
    %v1360 = vtanh.pop %v1359
    %v1361 = vmul.f32 %v1356, %v1360
    %1362 = vst.msk [vmem:[#allocation2 + $0x30] sm:$0xff] %vm305, %v1361
    %v1364 = vsel %vm305, %v1361, 0
    %1366 = vmatpush.msra.mxu0 0.0
    %1367 = vmatpush.msra.mxu0 0.0
    %1368 = vmatpush.msra.mxu0 0.0
    %1369 = vmatpush.msra.mxu0 0.0
    %1370 = vmatpush.msra.mxu0 0.0
    %1371 = vmatpush.msra.mxu0 0.0
    %1372 = vmatpush.msra.mxu0 0.0
    %1373 = vmatpush.msra.mxu0 0.0
    %1374 = vmatpush.msra.mxu0 0.0
    %1375 = vmatpush.msra.mxu0 0.0
    %1376 = vmatpush.msra.mxu0 0.0
    %1377 = vmatpush.msra.mxu0 0.0
    %1378 = vmatpush.msra.mxu0 %v287
    %1379 = vmatpush.msra.mxu0 %v286
    %1380 = vmatpush.msra.mxu0 %v285
    %1381 = vmatpush.msra.mxu0 %v284
    %1382 = vmatmul.f32.gmra.mxu0 %v1364
    %v1383 = vpop.f32.mrf.mxu0
    %v1384 = vadd.f32 0.0, %v1383
    %1385 = vdwg.mxu0
    %v1386 = vadd.f32 %v129, %v1384
    %v1387 = vxor.u32 %v1386, 2147483648
    %v1388 = vmul.f32 %v1387, 1.442695
    %v1389 = vpow.pop %v1388
    %v1390 = vadd.f32 %v1389, 1.0
    %v1391 = vrcp.pop %v1390
    %v1392 = vmul.f32 %v1390, %v1391
    %v1393 = vsub.f32 1.0, %v1392
    %v1394 = vmul.f32 %v1391, %v1393
    %v1395 = vadd.f32 %v1391, %v1394
    %vm1396 = vweird.f32 %v1390
    %vm1397 = vweird.f32 %v1391
    %vm1398 = vmor %vm1396, %vm1397
    %v1399 = vsel %vm1398, %v1391, %v1395
    %v1400 = vand.u32 2147483647, %v1390
    %vm1401 = vcmp.eq.f32.partialorder %v1400, 8.507059e+37
    %v1402 = vand.u32 %v1390, 2147483648
    %v1403 = vor.u32 1.1754944e-38, %v1402
    %v1404 = vsel %vm1401, %v1403, %v1399
    %v1405 = vmul.f32 1.0, %v1404
    %1406 = vmatpush.msra.mxu0 0.0
    %1407 = vmatpush.msra.mxu0 0.0
    %1408 = vmatpush.msra.mxu0 0.0
    %1409 = vmatpush.msra.mxu0 0.0
    %1410 = vmatpush.msra.mxu0 0.0
    %1411 = vmatpush.msra.mxu0 0.0
    %1412 = vmatpush.msra.mxu0 0.0
    %1413 = vmatpush.msra.mxu0 0.0
    %1414 = vmatpush.msra.mxu0 0.0
    %1415 = vmatpush.msra.mxu0 0.0
    %1416 = vmatpush.msra.mxu0 0.0
    %1417 = vmatpush.msra.mxu0 0.0
    %1418 = vmatpush.msra.mxu0 %v292
    %1419 = vmatpush.msra.mxu0 %v291
    %1420 = vmatpush.msra.mxu0 %v290
    %1421 = vmatpush.msra.mxu0 %v289
    %1422 = vmatmul.f32.gmra.mxu0 %v1364
    %v1423 = vpop.f32.mrf.mxu0
    %v1424 = vadd.f32 0.0, %v1423
    %1425 = vdwg.mxu0
    %v1426 = vadd.f32 %v180, %v1424
    %v1427 = vxor.u32 %v1426, 2147483648
    %v1428 = vmul.f32 %v1427, 1.442695
    %v1429 = vpow.pop %v1428
    %v1430 = vadd.f32 %v1429, 1.0
    %v1431 = vrcp.pop %v1430
    %v1432 = vmul.f32 %v1430, %v1431
    %v1433 = vsub.f32 1.0, %v1432
    %v1434 = vmul.f32 %v1431, %v1433
    %v1435 = vadd.f32 %v1431, %v1434
    %vm1436 = vweird.f32 %v1430
    %vm1437 = vweird.f32 %v1431
    %vm1438 = vmor %vm1436, %vm1437
    %v1439 = vsel %vm1438, %v1431, %v1435
    %v1440 = vand.u32 2147483647, %v1430
    %vm1441 = vcmp.eq.f32.partialorder %v1440, 8.507059e+37
    %v1442 = vand.u32 %v1430, 2147483648
    %v1443 = vor.u32 1.1754944e-38, %v1442
    %v1444 = vsel %vm1441, %v1443, %v1439
    %v1445 = vmul.f32 1.0, %v1444
    %1446 = vmatpush.msra.mxu0 0.0
    %1447 = vmatpush.msra.mxu0 0.0
    %1448 = vmatpush.msra.mxu0 0.0
    %1449 = vmatpush.msra.mxu0 0.0
    %1450 = vmatpush.msra.mxu0 0.0
    %1451 = vmatpush.msra.mxu0 0.0
    %1452 = vmatpush.msra.mxu0 0.0
    %1453 = vmatpush.msra.mxu0 0.0
    %1454 = vmatpush.msra.mxu0 0.0
    %1455 = vmatpush.msra.mxu0 0.0
    %1456 = vmatpush.msra.mxu0 0.0
    %1457 = vmatpush.msra.mxu0 0.0
    %1458 = vmatpush.msra.mxu0 %v297
    %1459 = vmatpush.msra.mxu0 %v296
    %1460 = vmatpush.msra.mxu0 %v295
    %1461 = vmatpush.msra.mxu0 %v294
    %1462 = vmatmul.f32.gmra.mxu0 %v1364
    %v1463 = vpop.f32.mrf.mxu0
    %v1464 = vadd.f32 0.0, %v1463
    %1465 = vdwg.mxu0
    %v1466 = vadd.f32 %v231, %v1464
    %v1467 = vtanh.pop %v1466
    %1468 = vmatpush.msra.mxu0 0.0
    %1469 = vmatpush.msra.mxu0 0.0
    %1470 = vmatpush.msra.mxu0 0.0
    %1471 = vmatpush.msra.mxu0 0.0
    %1472 = vmatpush.msra.mxu0 0.0
    %1473 = vmatpush.msra.mxu0 0.0
    %1474 = vmatpush.msra.mxu0 0.0
    %1475 = vmatpush.msra.mxu0 0.0
    %1476 = vmatpush.msra.mxu0 0.0
    %1477 = vmatpush.msra.mxu0 0.0
    %1478 = vmatpush.msra.mxu0 0.0
    %1479 = vmatpush.msra.mxu0 0.0
    %1480 = vmatpush.msra.mxu0 %v302
    %1481 = vmatpush.msra.mxu0 %v301
    %1482 = vmatpush.msra.mxu0 %v300
    %1483 = vmatpush.msra.mxu0 %v299
    %1484 = vmatmul.f32.gmra.mxu0 %v1364
    %v1485 = vpop.f32.mrf.mxu0
    %v1486 = vadd.f32 0.0, %v1485
    %1487 = vdwg.mxu0
    %v1488 = vadd.f32 %v282, %v1486
    %v1489 = vxor.u32 %v1488, 2147483648
    %v1490 = vmul.f32 %v1489, 1.442695
    %v1491 = vpow.pop %v1490
    %v1492 = vadd.f32 %v1491, 1.0
    %v1493 = vrcp.pop %v1492
    %v1494 = vmul.f32 %v1492, %v1493
    %v1495 = vsub.f32 1.0, %v1494
    %v1496 = vmul.f32 %v1493, %v1495
    %v1497 = vadd.f32 %v1493, %v1496
    %vm1498 = vweird.f32 %v1492
    %vm1499 = vweird.f32 %v1493
    %vm1500 = vmor %vm1498, %vm1499
    %v1501 = vsel %vm1500, %v1493, %v1497
    %v1502 = vand.u32 2147483647, %v1492
    %vm1503 = vcmp.eq.f32.partialorder %v1502, 8.507059e+37
    %v1504 = vand.u32 %v1492, 2147483648
    %v1505 = vor.u32 1.1754944e-38, %v1504
    %v1506 = vsel %vm1503, %v1505, %v1501
    %v1507 = vmul.f32 1.0, %v1506
    %v1508 = vmul.f32 %v1445, %v1359
    %v1509 = vmul.f32 %v1405, %v1467
    %v1510 = vadd.f32 %v1508, %v1509
    %v1511 = vtanh.pop %v1510
    %v1512 = vmul.f32 %v1507, %v1511
    %1513 = vst.msk [vmem:[#allocation2 + $0x38] sm:$0xff] %vm305, %v1512
    %1514 = vst.msk [vmem:[%s9] sm:$0xff] %vm305, %v1512
    %1515 = vst.msk [vmem:[%s10] sm:$0xff] %vm305, %v1510
    %v1516 = vld [vmem:[#allocation2] sm:$0xff]
    %v1517 = vld [vmem:[#allocation2 + $0x8] sm:$0xff]
    %v1518 = vld [vmem:[#allocation2 + $0x10] sm:$0xff]
    %v1519 = vld [vmem:[#allocation2 + $0x18] sm:$0xff]
    %v1520 = vld [vmem:[#allocation2 + $0x20] sm:$0xff]
    %v1521 = vld [vmem:[#allocation2 + $0x28] sm:$0xff]
    %v1522 = vld [vmem:[#allocation2 + $0x30] sm:$0xff]
    %v1523 = vld [vmem:[#allocation2 + $0x38] sm:$0xff]
    %v1524 = vld [vmem:[%s6] sm:$0xff]
    %v1525 = vld [vmem:[%s6 + $0x8] sm:$0xff]
    %v1526 = vld [vmem:[%s6 + $0x10] sm:$0xff]
    %v1527 = vld [vmem:[%s6 + $0x18] sm:$0xff]
    %v1528 = vld [vmem:[%s7] sm:$0x1]
    %v1530 = vperm.slane %v1528, 0
    %v1533 = vsel %vm305, %v1516, 0
    %v1536 = vsel %vm305, %v1517, 0
    %v1539 = vsel %vm305, %v1518, 0
    %v1542 = vsel %vm305, %v1519, 0
    %v1545 = vsel %vm305, %v1520, 0
    %v1548 = vsel %vm305, %v1521, 0
    %v1551 = vsel %vm305, %v1522, 0
    %v1554 = vsel %vm305, %v1523, 0
    %1556 = vmatpush.msra.mxu0 0.0
    %1557 = vmatpush.msra.mxu0 0.0
    %1558 = vmatpush.msra.mxu0 0.0
    %1559 = vmatpush.msra.mxu0 0.0
    %1560 = vmatpush.msra.mxu0 0.0
    %1561 = vmatpush.msra.mxu0 0.0
    %1562 = vmatpush.msra.mxu0 0.0
    %1563 = vmatpush.msra.mxu0 0.0
    %1564 = vmatpush.msra.mxu0 0.0
    %1565 = vmatpush.msra.mxu0 0.0
    %1566 = vmatpush.msra.mxu0 0.0
    %1567 = vmatpush.msra.mxu0 0.0
    %1568 = vmatpush.msra.mxu0 %v1527
    %1569 = vmatpush.msra.mxu0 %v1526
    %1570 = vmatpush.msra.mxu0 %v1525
    %1571 = vmatpush.msra.mxu0 %v1524
    %1572 = vmatmul.f32.gmra.mxu0 %v1533
    %v1573 = vpop.f32.mrf.mxu0
    %v1574 = vadd.f32 %v1530, %v1573
    %1575 = vmatmul.f32.gmra.mxu0 %v1536
    %v1576 = vpop.f32.mrf.mxu0
    %v1577 = vadd.f32 %v1530, %v1576
    %1578 = vmatmul.f32.gmra.mxu0 %v1539
    %v1579 = vpop.f32.mrf.mxu0
    %v1580 = vadd.f32 %v1530, %v1579
    %1581 = vmatmul.f32.gmra.mxu0 %v1542
    %v1582 = vpop.f32.mrf.mxu0
    %v1583 = vadd.f32 %v1530, %v1582
    %1584 = vmatmul.f32.gmra.mxu0 %v1545
    %v1585 = vpop.f32.mrf.mxu0
    %v1586 = vadd.f32 %v1530, %v1585
    %1587 = vmatmul.f32.gmra.mxu0 %v1548
    %v1588 = vpop.f32.mrf.mxu0
    %v1589 = vadd.f32 %v1530, %v1588
    %1590 = vmatmul.f32.gmra.mxu0 %v1551
    %v1591 = vpop.f32.mrf.mxu0
    %v1592 = vadd.f32 %v1530, %v1591
    %1593 = vmatmul.f32.gmra.mxu0 %v1554
    %v1594 = vpop.f32.mrf.mxu0
    %v1595 = vadd.f32 %v1530, %v1594
    %1596 = vdwg.mxu0
    %1597 = vst.msk [vmem:[%s8] sm:$0xff] %vm61, %v1574
    %1598 = vst.msk [vmem:[%s8 + $0x8] sm:$0xff] %vm61, %v1577
    %1599 = vst.msk [vmem:[%s8 + $0x10] sm:$0xff] %vm61, %v1580
    %1600 = vst.msk [vmem:[%s8 + $0x18] sm:$0xff] %vm61, %v1583
    %1601 = vst.msk [vmem:[%s8 + $0x20] sm:$0xff] %vm61, %v1586
    %1602 = vst.msk [vmem:[%s8 + $0x28] sm:$0xff] %vm61, %v1589
    %1603 = vst.msk [vmem:[%s8 + $0x30] sm:$0xff] %vm61, %v1592
    %1604 = vst.msk [vmem:[%s8 + $0x38] sm:$0xff] %vm61, %v1595
    // Predicated region
    $region38: #{teprnn_forward.1} parent=1 // pred_check
      _
    $region39: #{teprnn_forward.1} parent=1 // pred_check_branch
      %1606 = sbr.rel (0) target = $region41
    $region40: #{teprnn_forward.1} parent=1 // pred_region
      _
    $region41: #{teprnn_forward.1} parent=1 // pred_fallthru
      _
    // Predicated region
    $region42: #{teprnn_forward.1} parent=1 // pred_check
      _
    $region43: #{teprnn_forward.1} parent=1 // pred_check_branch
      %1608 = sbr.rel (0) target = $region45
    $region44: #{teprnn_forward.1} parent=1 // pred_region
      _
    $region45: #{teprnn_forward.1} parent=1 // pred_fallthru
      _
    // Predicated region
    $region46: #{teprnn_forward.1} parent=1 // pred_check
      _
    $region47: #{teprnn_forward.1} parent=1 // pred_check_branch
      %1610 = sbr.rel (0) target = $region49
    $region48: #{teprnn_forward.1} parent=1 // pred_region
      _
    $region49: #{teprnn_forward.1} parent=1 // pred_fallthru
      _
    // Predicated region
    $region50: #{teprnn_forward.1} parent=1 // pred_check
      _
    $region51: #{teprnn_forward.1} parent=1 // pred_check_branch
      %1612 = sbr.rel (0) target = $region53
    $region52: #{teprnn_forward.1} parent=1 // pred_region
      _
    $region53: #{teprnn_forward.1} parent=1 // pred_fallthru
      _
    // Predicated region
    $region54: #{teprnn_forward.1} parent=1 // pred_check
      _
    $region55: #{teprnn_forward.1} parent=1 // pred_check_branch
      %1614 = sbr.rel (0) target = $region57
    $region56: #{teprnn_forward.1} parent=1 // pred_region
      _
    $region57: #{teprnn_forward.1} parent=1 // pred_fallthru
      _
    // Predicated region
    $region58: #{teprnn_forward.1} parent=1 // pred_check
      _
    $region59: #{teprnn_forward.1} parent=1 // pred_check_branch
      %1616 = sbr.rel (0) target = $region61
    $region60: #{teprnn_forward.1} parent=1 // pred_region
      _
    $region61: #{teprnn_forward.1} parent=1 // pred_fallthru
      _
    %1617 = vsyncpa [#allocation4], 1

</llo_original>
